<compile_context>
chip_gen: v6e
topology: v6e:2x2x1
jax: 0.10.0
libtpu: 0.0.40
codegen_flags: <defaults>
</compile_context>

<pallas_src>
import jax
import jax.numpy as jnp
from jax.experimental import pallas as pl
from jax.experimental.pallas import tpu as pltpu


def _round_up(x, m):
    return ((x + m - 1) // m) * m


def _criticq_kernel(s_ref, a_ref, w1s_ref, w1a_ref, b1_ref,
                    w2_ref, b2_ref, w3_ref, b3_ref, o_ref):
    # ---- layer 1: fused concat -> two partial matmuls into one f32 accumulator.
    s = s_ref[...].astype(jnp.bfloat16)
    a = a_ref[...].astype(jnp.bfloat16)
    h1 = (jnp.dot(s, w1s_ref[...], preferred_element_type=jnp.float32)
          + jnp.dot(a, w1a_ref[...], preferred_element_type=jnp.float32)
          + b1_ref[...])
    h1 = jnp.maximum(h1, 0.0)                                   # f32 epilogue

    # ---- layer 2: bf16 operands, f32 accumulation.
    h2 = jnp.dot(h1.astype(jnp.bfloat16), w2_ref[...],
                 preferred_element_type=jnp.float32) + b2_ref[...]
    h2 = jnp.maximum(h2, 0.0)

    # ---- output layer, lane-dense: q_row = w3_row @ h2^T -> (1, tb).
    # Kept in f32 (tiny); one XLU transpose + a 1-row matmul avoids a 1-lane-wide
    # masked-store output tile.
    q = jnp.dot(w3_ref[...], h2.T, preferred_element_type=jnp.float32) + b3_ref[...]
    o_ref[...] = q.astype(o_ref.dtype)


def criticq_forward(state, action, params, *, tb=256):
    """state: [B, Ds] f32, action: [B, Da] f32 -> q: [B, 1] f32.

    params = (w1, b1, w2, b2, w3, b3), weights stored [in_features, out_features]
    (already transposed for x @ W): w1 [Ds+Da, H1], w2 [H1, H2], w3 [H2, 1].
    """
    w1, b1, w2, b2, w3, b3 = params
    B, Ds = state.shape
    Ba, Da = action.shape
    assert Ba == B, "state/action batch mismatch"
    in_dim, H1 = w1.shape
    H1w, H2 = w2.shape
    assert in_dim == Ds + Da and H1w == H1
    # The module's out layer is nn.Linear(hidden_dim1, 1) applied to an h2-dim
    # activation, which is only consistent when hidden_dim1 == hidden_dim2; here we
    # require w3's fan_in to equal h2's width explicitly.
    assert w3.shape == (H2, 1), "out-layer fan_in must equal hidden_dim2"

    # --- batch tiling: large MXU/lane-friendly tiles; pad ragged batches. ---
    if B >= tb:
        assert tb % 128 == 0, "batch tile must be a multiple of 128 when tiling"
        tb_eff = tb
    else:
        tb_eff = _round_up(B, 8)          # tiny batch: single (sublane-aligned) tile
    num_tiles = pl.cdiv(B, tb_eff)
    Bp = num_tiles * tb_eff
    if Bp != B:
        state = jnp.pad(state, ((0, Bp - B), (0, 0)))
        action = jnp.pad(action, ((0, Bp - B), (0, 0)))

    # Split W1 for the fused concat; bf16 weights for the two big matmuls.
    w1s = w1[:Ds].astype(jnp.bfloat16)            # [Ds, H1]
    w1a = w1[Ds:].astype(jnp.bfloat16)            # [Da, H1]
    w2b = w2.astype(jnp.bfloat16)                 # [H1, H2]
    w3r = w3.reshape(1, H2).astype(jnp.float32)   # lane-dense row form
    b1r = b1.reshape(1, H1).astype(jnp.float32)
    b2r = b2.reshape(1, H2).astype(jnp.float32)
    b3r = b3.reshape(1, 1).astype(jnp.float32)

    full = lambda i: (0, 0)                       # weights/biases resident for every tile
    out = pl.pallas_call(
        _criticq_kernel,
        out_shape=jax.ShapeDtypeStruct((1, Bp), jnp.float32),
        grid_spec=pltpu.PrefetchScalarGridSpec(
            num_scalar_prefetch=0,
            grid=(num_tiles,),
            in_specs=[
                pl.BlockSpec((tb_eff, Ds), lambda i: (i, 0)),   # state tile
                pl.BlockSpec((tb_eff, Da), lambda i: (i, 0)),   # action tile
                pl.BlockSpec((Ds, H1), full),                   # W1 (state half)
                pl.BlockSpec((Da, H1), full),                   # W1 (action half)
                pl.BlockSpec((1, H1), full),                    # b1
                pl.BlockSpec((H1, H2), full),                   # W2
                pl.BlockSpec((1, H2), full),                    # b2
                pl.BlockSpec((1, H2), full),                    # W3 row
                pl.BlockSpec((1, 1), full),                     # b3
            ],
            out_specs=pl.BlockSpec((1, tb_eff), lambda i: (0, i)),   # lane-dense q row
        ),
        compiler_params=pltpu.CompilerParams(
            dimension_semantics=("parallel",),    # shard batch tiles across TCs (v7x)
        ),
    )(state, action, w1s, w1a, b1r, w2b, b2r, w3r, b3r)

    return out[0, :B][:, None]                    # -> (B, 1)


def init_criticq_params(key, in_dim, hidden_dim1=256, hidden_dim2=256, init_w=0.003):
    """Mirror CriticQ.__init__: hidden layers use PyTorch-default U(+-1/sqrt(fan_in));
    the out layer uses init_layer_uniform -> U(+-init_w). Weights stored [in, out]."""
    # nn.Linear(hidden_dim1, 1) is applied to an h2-dim activation -> only consistent
    # when hidden_dim1 == hidden_dim2 (the module's implicit requirement).
    assert hidden_dim1 == hidden_dim2, "CriticQ requires hidden_dim1 == hidden_dim2"
    ks = jax.random.split(key, 6)

    def lin(kw, kb, fan_in, fan_out, bound):
        w = jax.random.uniform(kw, (fan_in, fan_out), jnp.float32, -bound, bound)
        b = jax.random.uniform(kb, (1, fan_out), jnp.float32, -bound, bound)
        return w, b

    w1, b1 = lin(ks[0], ks[1], in_dim, hidden_dim1, 1.0 / float(in_dim) ** 0.5)
    w2, b2 = lin(ks[2], ks[3], hidden_dim1, hidden_dim2, 1.0 / float(hidden_dim1) ** 0.5)
    w3, b3 = lin(ks[4], ks[5], hidden_dim2, 1, init_w)
    return (w1, b1, w2, b2, w3, b3)


def criticq_reference_f32(state, action, params):
    """Pure f32 reference (semantics of the PyTorch module)."""
    w1, b1, w2, b2, w3, b3 = params
    hi = jax.lax.Precision.HIGHEST
    x = jnp.concatenate([state, action], axis=-1)
    h1 = jnp.maximum(jnp.dot(x, w1, precision=hi) + b1, 0.0)
    h2 = jnp.maximum(jnp.dot(h1, w2, precision=hi) + b2, 0.0)
    return jnp.dot(h2, w3, precision=hi) + b3


def criticq_reference_bf16(state, action, params):
    """Reference mimicking the kernel numerics (bf16 matmul operands, f32 accumulate)."""
    w1, b1, w2, b2, w3, b3 = params
    x = jnp.concatenate([state, action], axis=-1).astype(jnp.bfloat16)
    h1 = jnp.maximum(
        jnp.dot(x, w1.astype(jnp.bfloat16), preferred_element_type=jnp.float32) + b1, 0.0)
    h2 = jnp.maximum(
        jnp.dot(h1.astype(jnp.bfloat16), w2.astype(jnp.bfloat16),
                preferred_element_type=jnp.float32) + b2, 0.0)
    return jnp.dot(h2, w3, preferred_element_type=jnp.float32) + b3


if __name__ == "__main__":
    key = jax.random.PRNGKey(0)
    k_s, k_a, k_p = jax.random.split(key, 3)

    B = 512            # -> two 256-row batch tiles: parallel grid of length 2 (both v7x TCs)
    Ds, Da = 24, 8     # state/action dims -> in_dim = 32
    H1 = H2 = 256      # module defaults (fills the 256-wide MXU on v6e/v7x)

    state = jax.random.normal(k_s, (B, Ds), jnp.float32)
    action = jax.random.normal(k_a, (B, Da), jnp.float32)
    params = init_criticq_params(k_p, Ds + Da, H1, H2)

    q = jax.block_until_ready(criticq_forward(state, action, params))
    assert q.shape == (B, 1)

    q_bf = criticq_reference_bf16(state, action, params)
    q_f32 = criticq_reference_f32(state, action, params)
    assert jnp.allclose(q, q_bf, atol=2e-3, rtol=1e-2), "mismatch vs bf16-matched reference"
    assert jnp.allclose(q, q_f32, atol=5e-3, rtol=1e-2), "mismatch vs f32 reference"

    print("KERNEL_OK")
</pallas_src>

<mosaic_0001>
module attributes {stable_mosaic.version = 11 : i64} {
  func.func @_criticq_kernel(%arg0: i32, %arg1: memref<256x24xf32, #tpu.memory_space<vmem>>, %arg2: memref<256x8xf32, #tpu.memory_space<vmem>>, %arg3: memref<24x256xbf16, #tpu.memory_space<vmem>>, %arg4: memref<8x256xbf16, #tpu.memory_space<vmem>>, %arg5: memref<1x256xf32, #tpu.memory_space<vmem>>, %arg6: memref<256x256xbf16, #tpu.memory_space<vmem>>, %arg7: memref<1x256xf32, #tpu.memory_space<vmem>>, %arg8: memref<1x256xf32, #tpu.memory_space<vmem>>, %arg9: memref<1x1xf32, #tpu.memory_space<vmem>>, %arg10: memref<1x256xf32, #tpu.memory_space<vmem>>) attributes {dimension_semantics = [#tpu.dimension_semantics<parallel>], iteration_bounds = array<i64: 2>, scalar_prefetch = 0 : i64, scratch_operands = 0 : i64, tpu.core_type = #tpu.core_type<tc>, window_params = [{transform_indices = @transform_0, window_bounds = array<i64: 256, 24>}, {transform_indices = @transform_1, window_bounds = array<i64: 256, 8>}, {pipeline_mode = #tpu.pipeline_mode<synchronous>, transform_indices = @transform_2, window_bounds = array<i64: 24, 256>}, {pipeline_mode = #tpu.pipeline_mode<synchronous>, transform_indices = @transform_3, window_bounds = array<i64: 8, 256>}, {pipeline_mode = #tpu.pipeline_mode<synchronous>, transform_indices = @transform_4, window_bounds = array<i64: 1, 256>}, {pipeline_mode = #tpu.pipeline_mode<synchronous>, transform_indices = @transform_5, window_bounds = array<i64: 256, 256>}, {pipeline_mode = #tpu.pipeline_mode<synchronous>, transform_indices = @transform_6, window_bounds = array<i64: 1, 256>}, {pipeline_mode = #tpu.pipeline_mode<synchronous>, transform_indices = @transform_7, window_bounds = array<i64: 1, 256>}, {pipeline_mode = #tpu.pipeline_mode<synchronous>, transform_indices = @transform_8, window_bounds = array<i64: 1, 1>}, {transform_indices = @transform_9, window_bounds = array<i64: 1, 256>}]} {
    %c0 = arith.constant 0 : index
    %c0_0 = arith.constant 0 : index
    %0 = vector.load %arg1[%c0, %c0_0] : memref<256x24xf32, #tpu.memory_space<vmem>>, vector<256x24xf32>
    %1 = arith.truncf %0 : vector<256x24xf32> to vector<256x24xbf16>
    %c0_1 = arith.constant 0 : index
    %c0_2 = arith.constant 0 : index
    %2 = vector.load %arg2[%c0_1, %c0_2] : memref<256x8xf32, #tpu.memory_space<vmem>>, vector<256x8xf32>
    %3 = arith.truncf %2 : vector<256x8xf32> to vector<256x8xbf16>
    %c0_3 = arith.constant 0 : index
    %c0_4 = arith.constant 0 : index
    %4 = vector.load %arg3[%c0_3, %c0_4] : memref<24x256xbf16, #tpu.memory_space<vmem>>, vector<24x256xbf16>
    %cst = arith.constant dense<0.000000e+00> : vector<256x256xf32>
    %5 = tpu.matmul %1, %4, %cst {dimension_numbers = #tpu.dot_dimension_numbers<[1], [0], [0], [1], [0, 0, 1, 1], [], []>} : vector<256x24xbf16>, vector<24x256xbf16>, vector<256x256xf32> -> vector<256x256xf32>
    %c0_5 = arith.constant 0 : index
    %c0_6 = arith.constant 0 : index
    %6 = vector.load %arg4[%c0_5, %c0_6] : memref<8x256xbf16, #tpu.memory_space<vmem>>, vector<8x256xbf16>
    %cst_7 = arith.constant dense<0.000000e+00> : vector<256x256xf32>
    %7 = tpu.matmul %3, %6, %cst_7 {dimension_numbers = #tpu.dot_dimension_numbers<[1], [0], [0], [1], [0, 0, 1, 1], [], []>} : vector<256x8xbf16>, vector<8x256xbf16>, vector<256x256xf32> -> vector<256x256xf32>
    %8 = arith.addf %5, %7 : vector<256x256xf32>
    %c0_8 = arith.constant 0 : index
    %c0_9 = arith.constant 0 : index
    %9 = vector.load %arg5[%c0_8, %c0_9] : memref<1x256xf32, #tpu.memory_space<vmem>>, vector<1x256xf32>
    %10 = vector.broadcast %9 : vector<1x256xf32> to vector<256x256xf32>
    %11 = arith.addf %8, %10 : vector<256x256xf32>
    %cst_10 = arith.constant 0.000000e+00 : f32
    %12 = vector.broadcast %cst_10 : f32 to vector<256x256xf32>
    %13 = arith.maximumf %11, %12 : vector<256x256xf32>
    %14 = arith.truncf %13 : vector<256x256xf32> to vector<256x256xbf16>
    %c0_11 = arith.constant 0 : index
    %c0_12 = arith.constant 0 : index
    %15 = vector.load %arg6[%c0_11, %c0_12] : memref<256x256xbf16, #tpu.memory_space<vmem>>, vector<256x256xbf16>
    %cst_13 = arith.constant dense<0.000000e+00> : vector<256x256xf32>
    %16 = tpu.matmul %14, %15, %cst_13 {dimension_numbers = #tpu.dot_dimension_numbers<[1], [0], [0], [1], [0, 0, 1, 1], [], []>} : vector<256x256xbf16>, vector<256x256xbf16>, vector<256x256xf32> -> vector<256x256xf32>
    %c0_14 = arith.constant 0 : index
    %c0_15 = arith.constant 0 : index
    %17 = vector.load %arg7[%c0_14, %c0_15] : memref<1x256xf32, #tpu.memory_space<vmem>>, vector<1x256xf32>
    %18 = vector.broadcast %17 : vector<1x256xf32> to vector<256x256xf32>
    %19 = arith.addf %16, %18 : vector<256x256xf32>
    %cst_16 = arith.constant 0.000000e+00 : f32
    %20 = vector.broadcast %cst_16 : f32 to vector<256x256xf32>
    %21 = arith.maximumf %19, %20 : vector<256x256xf32>
    %c0_17 = arith.constant 0 : index
    %c0_18 = arith.constant 0 : index
    %22 = vector.load %arg8[%c0_17, %c0_18] : memref<1x256xf32, #tpu.memory_space<vmem>>, vector<1x256xf32>
    %23 = tpu.transpose %21, [1, 0] : vector<256x256xf32> -> vector<256x256xf32>
    %cst_19 = arith.constant dense<0.000000e+00> : vector<1x256xf32>
    %24 = tpu.matmul %22, %23, %cst_19 {dimension_numbers = #tpu.dot_dimension_numbers<[1], [0], [0], [1], [0, 0, 1, 1], [], []>} : vector<1x256xf32>, vector<256x256xf32>, vector<1x256xf32> -> vector<1x256xf32>
    %c0_20 = arith.constant 0 : index
    %c0_21 = arith.constant 0 : index
    %25 = vector.load %arg9[%c0_20, %c0_21] : memref<1x1xf32, #tpu.memory_space<vmem>>, vector<1x1xf32>
    %26 = vector.broadcast %25 : vector<1x1xf32> to vector<1x256xf32>
    %27 = arith.addf %24, %26 : vector<1x256xf32>
    %c0_22 = arith.constant 0 : index
    %c0_23 = arith.constant 0 : index
    %28 = vector.load %arg10[%c0_22, %c0_23] : memref<1x256xf32, #tpu.memory_space<vmem>>, vector<1x256xf32>
    tpu.vector_store %arg10[%c0_22, %c0_23], %27 {strides = array<i32>} : memref<1x256xf32, #tpu.memory_space<vmem>>, vector<1x256xf32>,
    return
  }
  func.func @transform_0(%arg0: i32) -> (i32, i32) {
    %c0_i32 = arith.constant 0 : i32
    %c0_i32_0 = arith.constant 0 : i32
    return %arg0, %c0_i32 : i32, i32
  }
  func.func @transform_1(%arg0: i32) -> (i32, i32) {
    %c0_i32 = arith.constant 0 : i32
    %c0_i32_0 = arith.constant 0 : i32
    return %arg0, %c0_i32 : i32, i32
  }
  func.func @transform_2(%arg0: i32) -> (i32, i32) {
    %c0_i32 = arith.constant 0 : i32
    %c0_i32_0 = arith.constant 0 : i32
    %c0_i32_1 = arith.constant 0 : i32
    return %c0_i32, %c0_i32_0 : i32, i32
  }
  func.func @transform_3(%arg0: i32) -> (i32, i32) {
    %c0_i32 = arith.constant 0 : i32
    %c0_i32_0 = arith.constant 0 : i32
    %c0_i32_1 = arith.constant 0 : i32
    return %c0_i32, %c0_i32_0 : i32, i32
  }
  func.func @transform_4(%arg0: i32) -> (i32, i32) {
    %c0_i32 = arith.constant 0 : i32
    %c0_i32_0 = arith.constant 0 : i32
    %c0_i32_1 = arith.constant 0 : i32
    return %c0_i32, %c0_i32_0 : i32, i32
  }
  func.func @transform_5(%arg0: i32) -> (i32, i32) {
    %c0_i32 = arith.constant 0 : i32
    %c0_i32_0 = arith.constant 0 : i32
    %c0_i32_1 = arith.constant 0 : i32
    return %c0_i32, %c0_i32_0 : i32, i32
  }
  func.func @transform_6(%arg0: i32) -> (i32, i32) {
    %c0_i32 = arith.constant 0 : i32
    %c0_i32_0 = arith.constant 0 : i32
    %c0_i32_1 = arith.constant 0 : i32
    return %c0_i32, %c0_i32_0 : i32, i32
  }
  func.func @transform_7(%arg0: i32) -> (i32, i32) {
    %c0_i32 = arith.constant 0 : i32
    %c0_i32_0 = arith.constant 0 : i32
    %c0_i32_1 = arith.constant 0 : i32
    return %c0_i32, %c0_i32_0 : i32, i32
  }
  func.func @transform_8(%arg0: i32) -> (i32, i32) {
    %c0_i32 = arith.constant 0 : i32
    %c0_i32_0 = arith.constant 0 : i32
    %c0_i32_1 = arith.constant 0 : i32
    return %c0_i32, %c0_i32_0 : i32, i32
  }
  func.func @transform_9(%arg0: i32) -> (i32, i32) {
    %c0_i32 = arith.constant 0 : i32
    %c0_i32_0 = arith.constant 0 : i32
    return %c0_i32, %arg0 : i32, i32
  }
}

</mosaic_0001>

<llo_original>
// kernel: tpu_custom_call.1
$region0: #{tpu_custom_call.1}
  #allocation0 [shape = 'u32[]', space=smem, size = 0x4, offset = 0x4, fixed_abs, tag = 'smem constant byte address 0x4 - core index']
  #allocation1 [shape = 'u32[144,128]{1,0:T(1,128)}', space=vmem, size = 0x12000, scoped, tag = 'internal scratch']
  #allocation2 [shape = 'f32[1,1]{1,0:T(1,128)S(1)}', space=vmem, size = 0x200, scoped, tag = 'scoped memory for tpu_custom_call.1']
  %s0 = inlined_call_operand.vmem [shape: f32[512,24], index: 0, kind: input, shape index: {}]
  %s1 = inlined_call_operand.vmem [shape: f32[512,8], index: 1, kind: input, shape index: {}]
  %s2 = inlined_call_operand.vmem [shape: bf16[24,256], index: 2, kind: input, shape index: {}]
  %s3 = inlined_call_operand.vmem [shape: bf16[8,256], index: 3, kind: input, shape index: {}]
  %s4 = inlined_call_operand.vmem [shape: f32[1,256], index: 4, kind: input, shape index: {}]
  %s5 = inlined_call_operand.vmem [shape: bf16[256,256], index: 5, kind: input, shape index: {}]
  %s6 = inlined_call_operand.vmem [shape: f32[1,256], index: 6, kind: input, shape index: {}]
  %s7 = inlined_call_operand.vmem [shape: f32[1,256], index: 7, kind: input, shape index: {}]
  %s8 = inlined_call_operand.<no memory space> [shape: f32[1,1], index: 8, kind: input, shape index: {}]
  %s9 = inlined_call_operand.hbm [shape: f32[1,512], index: 9, kind: output, shape index: {}]
  %s10 = sld [smem:[#allocation0]]
  $region69: #{tpu_custom_call.1} parent=0
    _
  %s12 = ssub.s32 1, %s10
  %s13 = scalar_select 0, %s12, %s10
  %v14 = vstv %s8
  %15 = vst [vmem:[#allocation2] sm:$0x1] %v14
  $region1: #{tpu_custom_call.1} parent=0
    #allocation3 [shape = 'u8[2048]{0}', space=vmem, size = 0x800, scoped, tag = 'output window, operand 0']
    #allocation4 [shape = 's32[2]{0}', space=sflag, size = 0x8, scoped, tag = 'scoped memory for tpu_custom_call.1']
    %16 = vsyncpa [#allocation4], 0
    %s17 = scalar_lea.sflag [#allocation4], 1
    %18 = vsyncpa %s17, 0
    loop: start=0, step=1, limit=4
    $region2: #{tpu_custom_call.1} parent=1 // loop_pre_header
      _
    $region3: #{tpu_custom_call.1} parent=1 // loop_header
      %s20 = sphi 0, %s24
      %p21 = scmp.ge.s32.totalorder %s20, 4
      %s30 = sphi 0, %s32
      %s33 = sphi 0, %s30
      %s34 = sphi 0, %s33
      %s50 = sphi 0, %s34
      %s56 = sphi 0, %s58
      %s59 = sphi 0, %s56
      %s60 = sphi 0, %s59
      %s76 = sphi 0, %s60
      %s80 = sphi 0, %s80
      %s82 = sphi 0, %s80
      %s83 = sphi 0, %s82
      %s97 = sphi 0, %s83
      %s101 = sphi 0, %s101
      %s103 = sphi 0, %s101
      %s104 = sphi 0, %s103
      %s118 = sphi 0, %s104
      %s122 = sphi 0, %s122
      %s124 = sphi 0, %s122
      %s125 = sphi 0, %s124
      %s139 = sphi 0, %s125
      %s143 = sphi 0, %s143
      %s145 = sphi 0, %s143
      %s146 = sphi 0, %s145
      %s160 = sphi 0, %s146
      %s164 = sphi 0, %s164
      %s166 = sphi 0, %s164
      %s167 = sphi 0, %s166
      %s181 = sphi 0, %s167
      %s185 = sphi 0, %s185
      %s187 = sphi 0, %s185
      %s188 = sphi 0, %s187
      %s202 = sphi 0, %s188
      %s206 = sphi 0, %s206
      %s208 = sphi 0, %s206
      %s209 = sphi 0, %s208
      %s223 = sphi 0, %s209
      %s229 = sphi 0, %s231
      %s232 = sphi 0, %s229
      %s233 = sphi 0, %s232
      %s249 = sphi 0, %s233
    $region4: #{tpu_custom_call.1} parent=1 // loop_header_branch
      %23 = sbr.rel (%p21) target = $region8
    $region5: #{tpu_custom_call.1} parent=1 // loop_body
      %s25 = ssub.s32 %s20, 1
      %s26 = ssub.s32 %s20, 2
      %s27 = sadd.s32 %s20, 1
      %s28 = ssub.s32 %s20, %s27
      %p29 = scmp.eq.s32.totalorder %s28, 0
      %s31 = sadd.s32 %s30, 1
      %s32 = scalar_select %p29, %s30, %s31
      %p35 = pneg %p29
      %p36 = scmp.eq.s32.totalorder %s20, 1
      %p37 = por %p35, %p36
      %p38 = scmp.ne.s32.totalorder %s30, %s33
      %p39 = scmp.eq.s32.totalorder %s20, 0
      %p40 = por %p38, %p39
      %p41 = scmp.ne.s32.totalorder %s30, %s33
      %p42 = scmp.eq.s32.totalorder %s25, 1
      %p43 = por %p41, %p42
      %p44 = scmp.ne.s32.totalorder %s33, %s34
      %p45 = scmp.eq.s32.totalorder %s25, 0
      %p46 = por %p44, %p45
      %p47 = scmp.ne.s32.totalorder %s33, %s34
      %p48 = scmp.eq.s32.totalorder %s26, 1
      %p49 = por %p47, %p48
      %p51 = scmp.ne.s32.totalorder %s34, %s50
      %p52 = scmp.eq.s32.totalorder %s26, 0
      %p53 = por %p51, %p52
      %s54 = ssub.s32 %s20, %s27
      %p55 = scmp.eq.s32.totalorder %s54, 0
      %s57 = sadd.s32 %s56, 1
      %s58 = scalar_select %p55, %s56, %s57
      %p61 = pneg %p55
      %p62 = scmp.eq.s32.totalorder %s20, 1
      %p63 = por %p61, %p62
      %p64 = scmp.ne.s32.totalorder %s56, %s59
      %p65 = scmp.eq.s32.totalorder %s20, 0
      %p66 = por %p64, %p65
      %p67 = scmp.ne.s32.totalorder %s56, %s59
      %p68 = scmp.eq.s32.totalorder %s25, 1
      %p69 = por %p67, %p68
      %p70 = scmp.ne.s32.totalorder %s59, %s60
      %p71 = scmp.eq.s32.totalorder %s25, 0
      %p72 = por %p70, %p71
      %p73 = scmp.ne.s32.totalorder %s59, %s60
      %p74 = scmp.eq.s32.totalorder %s26, 1
      %p75 = por %p73, %p74
      %p77 = scmp.ne.s32.totalorder %s60, %s76
      %p78 = scmp.eq.s32.totalorder %s26, 0
      %p79 = por %p77, %p78
      %s81 = sadd.s32 %s80, 1
      %p84 = scmp.eq.s32.totalorder %s20, 1
      %p85 = scmp.ne.s32.totalorder %s80, %s82
      %p86 = scmp.eq.s32.totalorder %s20, 0
      %p87 = por %p85, %p86
      %p88 = scmp.ne.s32.totalorder %s80, %s82
      %p89 = scmp.eq.s32.totalorder %s25, 1
      %p90 = por %p88, %p89
      %p91 = scmp.ne.s32.totalorder %s82, %s83
      %p92 = scmp.eq.s32.totalorder %s25, 0
      %p93 = por %p91, %p92
      %p94 = scmp.ne.s32.totalorder %s82, %s83
      %p95 = scmp.eq.s32.totalorder %s26, 1
      %p96 = por %p94, %p95
      %p98 = scmp.ne.s32.totalorder %s83, %s97
      %p99 = scmp.eq.s32.totalorder %s26, 0
      %p100 = por %p98, %p99
      %s102 = sadd.s32 %s101, 1
      %p105 = scmp.eq.s32.totalorder %s20, 1
      %p106 = scmp.ne.s32.totalorder %s101, %s103
      %p107 = scmp.eq.s32.totalorder %s20, 0
      %p108 = por %p106, %p107
      %p109 = scmp.ne.s32.totalorder %s101, %s103
      %p110 = scmp.eq.s32.totalorder %s25, 1
      %p111 = por %p109, %p110
      %p112 = scmp.ne.s32.totalorder %s103, %s104
      %p113 = scmp.eq.s32.totalorder %s25, 0
      %p114 = por %p112, %p113
      %p115 = scmp.ne.s32.totalorder %s103, %s104
      %p116 = scmp.eq.s32.totalorder %s26, 1
      %p117 = por %p115, %p116
      %p119 = scmp.ne.s32.totalorder %s104, %s118
      %p120 = scmp.eq.s32.totalorder %s26, 0
      %p121 = por %p119, %p120
      %s123 = sadd.s32 %s122, 1
      %p126 = scmp.eq.s32.totalorder %s20, 1
      %p127 = scmp.ne.s32.totalorder %s122, %s124
      %p128 = scmp.eq.s32.totalorder %s20, 0
      %p129 = por %p127, %p128
      %p130 = scmp.ne.s32.totalorder %s122, %s124
      %p131 = scmp.eq.s32.totalorder %s25, 1
      %p132 = por %p130, %p131
      %p133 = scmp.ne.s32.totalorder %s124, %s125
      %p134 = scmp.eq.s32.totalorder %s25, 0
      %p135 = por %p133, %p134
      %p136 = scmp.ne.s32.totalorder %s124, %s125
      %p137 = scmp.eq.s32.totalorder %s26, 1
      %p138 = por %p136, %p137
      %p140 = scmp.ne.s32.totalorder %s125, %s139
      %p141 = scmp.eq.s32.totalorder %s26, 0
      %p142 = por %p140, %p141
      %s144 = sadd.s32 %s143, 1
      %p147 = scmp.eq.s32.totalorder %s20, 1
      %p148 = scmp.ne.s32.totalorder %s143, %s145
      %p149 = scmp.eq.s32.totalorder %s20, 0
      %p150 = por %p148, %p149
      %p151 = scmp.ne.s32.totalorder %s143, %s145
      %p152 = scmp.eq.s32.totalorder %s25, 1
      %p153 = por %p151, %p152
      %p154 = scmp.ne.s32.totalorder %s145, %s146
      %p155 = scmp.eq.s32.totalorder %s25, 0
      %p156 = por %p154, %p155
      %p157 = scmp.ne.s32.totalorder %s145, %s146
      %p158 = scmp.eq.s32.totalorder %s26, 1
      %p159 = por %p157, %p158
      %p161 = scmp.ne.s32.totalorder %s146, %s160
      %p162 = scmp.eq.s32.totalorder %s26, 0
      %p163 = por %p161, %p162
      %s165 = sadd.s32 %s164, 1
      %p168 = scmp.eq.s32.totalorder %s20, 1
      %p169 = scmp.ne.s32.totalorder %s164, %s166
      %p170 = scmp.eq.s32.totalorder %s20, 0
      %p171 = por %p169, %p170
      %p172 = scmp.ne.s32.totalorder %s164, %s166
      %p173 = scmp.eq.s32.totalorder %s25, 1
      %p174 = por %p172, %p173
      %p175 = scmp.ne.s32.totalorder %s166, %s167
      %p176 = scmp.eq.s32.totalorder %s25, 0
      %p177 = por %p175, %p176
      %p178 = scmp.ne.s32.totalorder %s166, %s167
      %p179 = scmp.eq.s32.totalorder %s26, 1
      %p180 = por %p178, %p179
      %p182 = scmp.ne.s32.totalorder %s167, %s181
      %p183 = scmp.eq.s32.totalorder %s26, 0
      %p184 = por %p182, %p183
      %s186 = sadd.s32 %s185, 1
      %p189 = scmp.eq.s32.totalorder %s20, 1
      %p190 = scmp.ne.s32.totalorder %s185, %s187
      %p191 = scmp.eq.s32.totalorder %s20, 0
      %p192 = por %p190, %p191
      %p193 = scmp.ne.s32.totalorder %s185, %s187
      %p194 = scmp.eq.s32.totalorder %s25, 1
      %p195 = por %p193, %p194
      %p196 = scmp.ne.s32.totalorder %s187, %s188
      %p197 = scmp.eq.s32.totalorder %s25, 0
      %p198 = por %p196, %p197
      %p199 = scmp.ne.s32.totalorder %s187, %s188
      %p200 = scmp.eq.s32.totalorder %s26, 1
      %p201 = por %p199, %p200
      %p203 = scmp.ne.s32.totalorder %s188, %s202
      %p204 = scmp.eq.s32.totalorder %s26, 0
      %p205 = por %p203, %p204
      %s207 = sadd.s32 %s206, 1
      %p210 = scmp.eq.s32.totalorder %s20, 1
      %p211 = scmp.ne.s32.totalorder %s206, %s208
      %p212 = scmp.eq.s32.totalorder %s20, 0
      %p213 = por %p211, %p212
      %p214 = scmp.ne.s32.totalorder %s206, %s208
      %p215 = scmp.eq.s32.totalorder %s25, 1
      %p216 = por %p214, %p215
      %p217 = scmp.ne.s32.totalorder %s208, %s209
      %p218 = scmp.eq.s32.totalorder %s25, 0
      %p219 = por %p217, %p218
      %p220 = scmp.ne.s32.totalorder %s208, %s209
      %p221 = scmp.eq.s32.totalorder %s26, 1
      %p222 = por %p220, %p221
      %p224 = scmp.ne.s32.totalorder %s209, %s223
      %p225 = scmp.eq.s32.totalorder %s26, 0
      %p226 = por %p224, %p225
      %s227 = ssub.s32 %s20, %s27
      %p228 = scmp.eq.s32.totalorder %s227, 0
      %s230 = sadd.s32 %s229, 1
      %s231 = scalar_select %p228, %s229, %s230
      %p234 = pneg %p228
      %p235 = scmp.eq.s32.totalorder %s20, 1
      %p236 = por %p234, %p235
      %p237 = scmp.ne.s32.totalorder %s229, %s232
      %p238 = scmp.eq.s32.totalorder %s20, 0
      %p239 = por %p237, %p238
      %p240 = scmp.ne.s32.totalorder %s229, %s232
      %p241 = scmp.eq.s32.totalorder %s25, 1
      %p242 = por %p240, %p241
      %p243 = scmp.ne.s32.totalorder %s232, %s233
      %p244 = scmp.eq.s32.totalorder %s25, 0
      %p245 = por %p243, %p244
      %p246 = scmp.ne.s32.totalorder %s232, %s233
      %p247 = scmp.eq.s32.totalorder %s26, 1
      %p248 = por %p246, %p247
      %p250 = scmp.ne.s32.totalorder %s233, %s249
      %p251 = scmp.eq.s32.totalorder %s26, 0
      %p252 = por %p250, %p251
      %p253 = scmp.le.s32.totalorder 1, %s20
      %p254 = scmp.lt.s32.totalorder %s20, 3
      %p255 = pnand %p253, %p254
      %p256 = pneg %p255
      // Predicated region
      $region9: #{tpu_custom_call.1} parent=5 // pred_check
        _
      $region10: #{tpu_custom_call.1} parent=5 // pred_check_branch
        %258 = sbr.rel (%p255) target = $region12
      $region11: #{tpu_custom_call.1} parent=5 // pred_region
        %s259 = ssub.s32 %s20, 1
        // Predicated region
        $region13: #{tpu_custom_call.1} parent=11 // pred_check
          %p260 = pneg %p93
        $region14: #{tpu_custom_call.1} parent=11 // pred_check_branch
          %262 = sbr.rel (%p260) target = $region16
        $region15: #{tpu_custom_call.1} parent=11 // pred_region
          _
        $region16: #{tpu_custom_call.1} parent=11 // pred_fallthru
          _
        // Predicated region
        $region17: #{tpu_custom_call.1} parent=11 // pred_check
          %p263 = pneg %p114
        $region18: #{tpu_custom_call.1} parent=11 // pred_check_branch
          %265 = sbr.rel (%p263) target = $region20
        $region19: #{tpu_custom_call.1} parent=11 // pred_region
          _
        $region20: #{tpu_custom_call.1} parent=11 // pred_fallthru
          _
        // Predicated region
        $region21: #{tpu_custom_call.1} parent=11 // pred_check
          %p266 = pneg %p135
        $region22: #{tpu_custom_call.1} parent=11 // pred_check_branch
          %268 = sbr.rel (%p266) target = $region24
        $region23: #{tpu_custom_call.1} parent=11 // pred_region
          _
        $region24: #{tpu_custom_call.1} parent=11 // pred_fallthru
          _
        // Predicated region
        $region25: #{tpu_custom_call.1} parent=11 // pred_check
          %p269 = pneg %p156
        $region26: #{tpu_custom_call.1} parent=11 // pred_check_branch
          %271 = sbr.rel (%p269) target = $region28
        $region27: #{tpu_custom_call.1} parent=11 // pred_region
          _
        $region28: #{tpu_custom_call.1} parent=11 // pred_fallthru
          _
        // Predicated region
        $region29: #{tpu_custom_call.1} parent=11 // pred_check
          %p272 = pneg %p177
        $region30: #{tpu_custom_call.1} parent=11 // pred_check_branch
          %274 = sbr.rel (%p272) target = $region32
        $region31: #{tpu_custom_call.1} parent=11 // pred_region
          _
        $region32: #{tpu_custom_call.1} parent=11 // pred_fallthru
          _
        // Predicated region
        $region33: #{tpu_custom_call.1} parent=11 // pred_check
          %p275 = pneg %p198
        $region34: #{tpu_custom_call.1} parent=11 // pred_check_branch
          %277 = sbr.rel (%p275) target = $region36
        $region35: #{tpu_custom_call.1} parent=11 // pred_region
          _
        $region36: #{tpu_custom_call.1} parent=11 // pred_fallthru
          _
        // Predicated region
        $region37: #{tpu_custom_call.1} parent=11 // pred_check
          %p278 = pneg %p219
        $region38: #{tpu_custom_call.1} parent=11 // pred_check_branch
          %280 = sbr.rel (%p278) target = $region40
        $region39: #{tpu_custom_call.1} parent=11 // pred_region
          _
        $region40: #{tpu_custom_call.1} parent=11 // pred_fallthru
          _
      $region12: #{tpu_custom_call.1} parent=5 // pred_fallthru
        _
      %p281 = scmp.lt.s32.totalorder %s20, 2
      // Predicated region
      $region41: #{tpu_custom_call.1} parent=5 // pred_check
        %p282 = pneg %p281
      $region42: #{tpu_custom_call.1} parent=5 // pred_check_branch
        %284 = sbr.rel (%p282) target = $region44
      $region43: #{tpu_custom_call.1} parent=5 // pred_region
        // Predicated region
        $region45: #{tpu_custom_call.1} parent=43 // pred_check
          %p285 = pneg %p40
        $region46: #{tpu_custom_call.1} parent=43 // pred_check_branch
          %287 = sbr.rel (%p285) target = $region48
        $region47: #{tpu_custom_call.1} parent=43 // pred_region
          %s288 = smul.u32 32, %s20
          %p289 = scmp.lt.s32.totalorder %s288, 63
          %s290 = scalar_select %p289, %s288, 63
          %s291 = smul.addr %s290, 8
          %s292 = scalar_lea.vmem %s0, %s291
          %s293 = smul.u32 32, %s20
        $region48: #{tpu_custom_call.1} parent=43 // pred_fallthru
          _
        // Predicated region
        $region49: #{tpu_custom_call.1} parent=43 // pred_check
          %p294 = pneg %p66
        $region50: #{tpu_custom_call.1} parent=43 // pred_check_branch
          %296 = sbr.rel (%p294) target = $region52
        $region51: #{tpu_custom_call.1} parent=43 // pred_region
          %s297 = smul.u32 32, %s20
          %p298 = scmp.lt.s32.totalorder %s297, 63
          %s299 = scalar_select %p298, %s297, 63
          %s300 = smul.addr %s299, 8
          %s301 = scalar_lea.vmem %s1, %s300
          %s302 = smul.u32 32, %s20
        $region52: #{tpu_custom_call.1} parent=43 // pred_fallthru
          _
      $region44: #{tpu_custom_call.1} parent=5 // pred_fallthru
        _
      %p303 = scmp.le.s32.totalorder 1, %s20
      %p304 = scmp.lt.s32.totalorder %s20, 3
      %p305 = pnand %p303, %p304
      %p306 = pneg %p305
      // Predicated region
      $region53: #{tpu_custom_call.1} parent=5 // pred_check
        _
      $region54: #{tpu_custom_call.1} parent=5 // pred_check_branch
        %308 = sbr.rel (%p305) target = $region56
      $region55: #{tpu_custom_call.1} parent=5 // pred_region
        %s309 = ssub.s32 %s20, 1
        %s310 = smul.u32 32, %s25
        %p311 = scmp.lt.s32.totalorder %s310, 63
        %s312 = scalar_select %p311, %s310, 63
        %s313 = smul.addr %s312, 8
        %s314 = scalar_lea.vmem %s0, %s313
        %p315 = pneg %p46
        %p316 = pneg %p43
        %s317 = smul.u32 32, %s25
        %p318 = scmp.lt.s32.totalorder %s317, 63
        %s319 = scalar_select %p318, %s317, 63
        %s320 = smul.addr %s319, 8
        %s321 = scalar_lea.vmem %s1, %s320
        %p322 = pneg %p72
        %p323 = pneg %p69
        %p324 = pneg %p93
        %p325 = pneg %p90
        %p326 = pneg %p114
        %p327 = pneg %p111
        %p328 = pneg %p135
        %p329 = pneg %p132
        %p330 = pneg %p156
        %p331 = pneg %p153
        %p332 = pneg %p177
        %p333 = pneg %p174
        %p334 = pneg %p198
        %p335 = pneg %p195
        %p336 = pneg %p219
        %p337 = pneg %p216
        %p338 = pneg %p245
        %p339 = pneg %p242
        %s340 = sand.u32 %s232, 1
        %s341 = scalar_lea.sflag [#allocation4], %s340
        %s342 = sand.u32 %s232, 1
        %s343 = smul.addr %s342, 2
        %s344 = scalar_lea.vmem [#allocation3], %s343
        %s345 = smul.u32 32, %s25
        %p346 = scmp.lt.s32.totalorder %s345, 63
        %s347 = scalar_select %p346, %s345, 63
        %s348 = smul.addr %s347, 8
        %s349 = scalar_lea.vmem %s0, %s348
        %s350 = smul.u32 32, %s25
        %s351 = smul.u32 32, %s25
        %p352 = scmp.lt.s32.totalorder %s351, 63
        %s353 = scalar_select %p352, %s351, 63
        %s354 = smul.addr %s353, 8
        %s355 = scalar_lea.vmem %s1, %s354
        %s356 = smul.u32 32, %s25
        %s357 = smul.u32 2, %s25
        %v359 = vld [vmem:[%s349] sm:$0xff]
        %v360 = vld [vmem:[%s349 + $0x8] sm:$0xff]
        %v361 = vld [vmem:[%s349 + $0x10] sm:$0xff]
        %v362 = vld [vmem:[%s349 + $0x18] sm:$0xff]
        %v363 = vld [vmem:[%s349 + $0x20] sm:$0xff]
        %v364 = vld [vmem:[%s349 + $0x28] sm:$0xff]
        %v365 = vld [vmem:[%s349 + $0x30] sm:$0xff]
        %v366 = vld [vmem:[%s349 + $0x38] sm:$0xff]
        %v367 = vld [vmem:[%s349 + $0x40] sm:$0xff]
        %v368 = vld [vmem:[%s349 + $0x48] sm:$0xff]
        %v369 = vld [vmem:[%s349 + $0x50] sm:$0xff]
        %v370 = vld [vmem:[%s349 + $0x58] sm:$0xff]
        %v371 = vld [vmem:[%s349 + $0x60] sm:$0xff]
        %v372 = vld [vmem:[%s349 + $0x68] sm:$0xff]
        %v373 = vld [vmem:[%s349 + $0x70] sm:$0xff]
        %v374 = vld [vmem:[%s349 + $0x78] sm:$0xff]
        %v375 = vld [vmem:[%s349 + $0x80] sm:$0xff]
        %v376 = vld [vmem:[%s349 + $0x88] sm:$0xff]
        %v377 = vld [vmem:[%s349 + $0x90] sm:$0xff]
        %v378 = vld [vmem:[%s349 + $0x98] sm:$0xff]
        %v379 = vld [vmem:[%s349 + $0xa0] sm:$0xff]
        %v380 = vld [vmem:[%s349 + $0xa8] sm:$0xff]
        %v381 = vld [vmem:[%s349 + $0xb0] sm:$0xff]
        %v382 = vld [vmem:[%s349 + $0xb8] sm:$0xff]
        %v383 = vld [vmem:[%s349 + $0xc0] sm:$0xff]
        %v384 = vld [vmem:[%s349 + $0xc8] sm:$0xff]
        %v385 = vld [vmem:[%s349 + $0xd0] sm:$0xff]
        %v386 = vld [vmem:[%s349 + $0xd8] sm:$0xff]
        %v387 = vld [vmem:[%s349 + $0xe0] sm:$0xff]
        %v388 = vld [vmem:[%s349 + $0xe8] sm:$0xff]
        %v389 = vld [vmem:[%s349 + $0xf0] sm:$0xff]
        %v390 = vld [vmem:[%s349 + $0xf8] sm:$0xff]
        %v391 = vpack.c.bf16 %v360, %v359
        %v392 = vpack.c.bf16 %v362, %v361
        %v393 = vpack.c.bf16 %v364, %v363
        %v394 = vpack.c.bf16 %v366, %v365
        %v395 = vpack.c.bf16 %v368, %v367
        %v396 = vpack.c.bf16 %v370, %v369
        %v397 = vpack.c.bf16 %v372, %v371
        %v398 = vpack.c.bf16 %v374, %v373
        %v399 = vpack.c.bf16 %v376, %v375
        %v400 = vpack.c.bf16 %v378, %v377
        %v401 = vpack.c.bf16 %v380, %v379
        %v402 = vpack.c.bf16 %v382, %v381
        %v403 = vpack.c.bf16 %v384, %v383
        %v404 = vpack.c.bf16 %v386, %v385
        %v405 = vpack.c.bf16 %v388, %v387
        %v406 = vpack.c.bf16 %v390, %v389
        %v407 = vld [vmem:[%s355] sm:$0xff]
        %v408 = vld [vmem:[%s355 + $0x8] sm:$0xff]
        %v409 = vld [vmem:[%s355 + $0x10] sm:$0xff]
        %v410 = vld [vmem:[%s355 + $0x18] sm:$0xff]
        %v411 = vld [vmem:[%s355 + $0x20] sm:$0xff]
        %v412 = vld [vmem:[%s355 + $0x28] sm:$0xff]
        %v413 = vld [vmem:[%s355 + $0x30] sm:$0xff]
        %v414 = vld [vmem:[%s355 + $0x38] sm:$0xff]
        %v415 = vld [vmem:[%s355 + $0x40] sm:$0xff]
        %v416 = vld [vmem:[%s355 + $0x48] sm:$0xff]
        %v417 = vld [vmem:[%s355 + $0x50] sm:$0xff]
        %v418 = vld [vmem:[%s355 + $0x58] sm:$0xff]
        %v419 = vld [vmem:[%s355 + $0x60] sm:$0xff]
        %v420 = vld [vmem:[%s355 + $0x68] sm:$0xff]
        %v421 = vld [vmem:[%s355 + $0x70] sm:$0xff]
        %v422 = vld [vmem:[%s355 + $0x78] sm:$0xff]
        %v423 = vld [vmem:[%s355 + $0x80] sm:$0xff]
        %v424 = vld [vmem:[%s355 + $0x88] sm:$0xff]
        %v425 = vld [vmem:[%s355 + $0x90] sm:$0xff]
        %v426 = vld [vmem:[%s355 + $0x98] sm:$0xff]
        %v427 = vld [vmem:[%s355 + $0xa0] sm:$0xff]
        %v428 = vld [vmem:[%s355 + $0xa8] sm:$0xff]
        %v429 = vld [vmem:[%s355 + $0xb0] sm:$0xff]
        %v430 = vld [vmem:[%s355 + $0xb8] sm:$0xff]
        %v431 = vld [vmem:[%s355 + $0xc0] sm:$0xff]
        %v432 = vld [vmem:[%s355 + $0xc8] sm:$0xff]
        %v433 = vld [vmem:[%s355 + $0xd0] sm:$0xff]
        %v434 = vld [vmem:[%s355 + $0xd8] sm:$0xff]
        %v435 = vld [vmem:[%s355 + $0xe0] sm:$0xff]
        %v436 = vld [vmem:[%s355 + $0xe8] sm:$0xff]
        %v437 = vld [vmem:[%s355 + $0xf0] sm:$0xff]
        %v438 = vld [vmem:[%s355 + $0xf8] sm:$0xff]
        %v439 = vpack.c.bf16 %v408, %v407
        %v440 = vpack.c.bf16 %v410, %v409
        %v441 = vpack.c.bf16 %v412, %v411
        %v442 = vpack.c.bf16 %v414, %v413
        %v443 = vpack.c.bf16 %v416, %v415
        %v444 = vpack.c.bf16 %v418, %v417
        %v445 = vpack.c.bf16 %v420, %v419
        %v446 = vpack.c.bf16 %v422, %v421
        %v447 = vpack.c.bf16 %v424, %v423
        %v448 = vpack.c.bf16 %v426, %v425
        %v449 = vpack.c.bf16 %v428, %v427
        %v450 = vpack.c.bf16 %v430, %v429
        %v451 = vpack.c.bf16 %v432, %v431
        %v452 = vpack.c.bf16 %v434, %v433
        %v453 = vpack.c.bf16 %v436, %v435
        %v454 = vpack.c.bf16 %v438, %v437
        %v455 = vld [vmem:[%s2] sm:$0xff]
        %v456 = vld [vmem:[%s2 + $0x8] sm:$0xff]
        %v457 = vld [vmem:[%s2 + $0x10] sm:$0xff]
        %v458 = vld [vmem:[%s3] sm:$0xff]
        %v460 = vunpack.c.l.b16 %v458
        %v461 = vunpack.c.h.b16 %v458
        %v462 = vpack.c.b16 %v460, %v460
        %v463 = vpack.c.b16 %v461, %v461
        %vm464 = vcmask 64512
        %v466 = vsel %vm464, %v439, 0
        %v469 = vsel %vm464, %v440, 0
        %v472 = vsel %vm464, %v441, 0
        %v475 = vsel %vm464, %v442, 0
        %v478 = vsel %vm464, %v443, 0
        %v481 = vsel %vm464, %v444, 0
        %v484 = vsel %vm464, %v445, 0
        %v487 = vsel %vm464, %v446, 0
        %v490 = vsel %vm464, %v447, 0
        %v493 = vsel %vm464, %v448, 0
        %v496 = vsel %vm464, %v449, 0
        %v499 = vsel %vm464, %v450, 0
        %v502 = vsel %vm464, %v451, 0
        %v505 = vsel %vm464, %v452, 0
        %v508 = vsel %vm464, %v453, 0
        %v511 = vsel %vm464, %v454, 0
        %vm513 = vcmask 1043456
        %v515 = vsel %vm513, %v462, 0
        %v518 = vsel %vm513, %v463, 0
        %520 = vmatprep.subr.bf16.mxu0 0
        %521 = vmatpush1.bf16.msra.mxu0 0
        %522 = vmatprep.subr.bf16.mxu0 0
        %523 = vmatpush1.bf16.msra.mxu0 0
        %524 = vmatprep.subr.bf16.mxu0 0
        %525 = vmatpush1.bf16.msra.mxu0 0
        %526 = vmatprep.subr.bf16.mxu0 0
        %527 = vmatpush1.bf16.msra.mxu0 0
        %528 = vmatprep.subr.bf16.mxu0 0
        %529 = vmatpush1.bf16.msra.mxu0 0
        %530 = vmatprep.subr.bf16.mxu0 0
        %531 = vmatpush1.bf16.msra.mxu0 0
        %532 = vmatprep.subr.bf16.mxu0 0
        %533 = vmatpush1.bf16.msra.mxu0 0
        %534 = vmatprep.subr.bf16.mxu0 %v518
        %535 = vmatpush1.bf16.msra.mxu0 %v515
        %536 = vmatprep.subr.bf16.mxu0 0
        %537 = vmatpush2.bf16.msra.mxu0 0
        %538 = vmatprep.subr.bf16.mxu0 0
        %539 = vmatpush2.bf16.msra.mxu0 0
        %540 = vmatprep.subr.bf16.mxu0 0
        %541 = vmatpush2.bf16.msra.mxu0 0
        %542 = vmatprep.subr.bf16.mxu0 0
        %543 = vmatpush2.bf16.msra.mxu0 0
        %544 = vmatprep.subr.bf16.mxu0 0
        %545 = vmatpush2.bf16.msra.mxu0 0
        %546 = vmatprep.subr.bf16.mxu0 0
        %547 = vmatpush2.bf16.msra.mxu0 0
        %548 = vmatprep.subr.bf16.mxu0 0
        %549 = vmatpush2.bf16.msra.mxu0 0
        %550 = vmatprep.subr.bf16.mxu0 0
        %551 = vmatpush2.bf16.msra.mxu0 0
        %552 = vmatprep.mubr.bf16.mxu0 0
        %553 = vmatmul.mubr.bf16.gmra.mxu0 %v466
        %v554 = vpop.f32.mrf.mxu0
        %v555 = vadd.f32 0.0, %v554
        %v556 = vpop.f32.mrf.mxu0
        %v557 = vadd.f32 0.0, %v556
        %v558 = vpop.f32.mrf.mxu0
        %v559 = vadd.f32 0.0, %v558
        %v560 = vpop.f32.mrf.mxu0
        %v561 = vadd.f32 0.0, %v560
        %562 = vmatprep.mubr.bf16.mxu0 0
        %563 = vmatmul.mubr.bf16.gmra.mxu0 %v469
        %v564 = vpop.f32.mrf.mxu0
        %v565 = vadd.f32 0.0, %v564
        %v566 = vpop.f32.mrf.mxu0
        %v567 = vadd.f32 0.0, %v566
        %v568 = vpop.f32.mrf.mxu0
        %v569 = vadd.f32 0.0, %v568
        %v570 = vpop.f32.mrf.mxu0
        %v571 = vadd.f32 0.0, %v570
        %572 = vmatprep.mubr.bf16.mxu0 0
        %573 = vmatmul.mubr.bf16.gmra.mxu0 %v472
        %v574 = vpop.f32.mrf.mxu0
        %v575 = vadd.f32 0.0, %v574
        %v576 = vpop.f32.mrf.mxu0
        %v577 = vadd.f32 0.0, %v576
        %v578 = vpop.f32.mrf.mxu0
        %v579 = vadd.f32 0.0, %v578
        %v580 = vpop.f32.mrf.mxu0
        %v581 = vadd.f32 0.0, %v580
        %582 = vmatprep.mubr.bf16.mxu0 0
        %583 = vmatmul.mubr.bf16.gmra.mxu0 %v475
        %v584 = vpop.f32.mrf.mxu0
        %v585 = vadd.f32 0.0, %v584
        %v586 = vpop.f32.mrf.mxu0
        %v587 = vadd.f32 0.0, %v586
        %v588 = vpop.f32.mrf.mxu0
        %v589 = vadd.f32 0.0, %v588
        %v590 = vpop.f32.mrf.mxu0
        %v591 = vadd.f32 0.0, %v590
        %592 = vmatprep.mubr.bf16.mxu0 0
        %593 = vmatmul.mubr.bf16.gmra.mxu0 %v478
        %v594 = vpop.f32.mrf.mxu0
        %v595 = vadd.f32 0.0, %v594
        %v596 = vpop.f32.mrf.mxu0
        %v597 = vadd.f32 0.0, %v596
        %v598 = vpop.f32.mrf.mxu0
        %v599 = vadd.f32 0.0, %v598
        %v600 = vpop.f32.mrf.mxu0
        %v601 = vadd.f32 0.0, %v600
        %602 = vmatprep.mubr.bf16.mxu0 0
        %603 = vmatmul.mubr.bf16.gmra.mxu0 %v481
        %v604 = vpop.f32.mrf.mxu0
        %v605 = vadd.f32 0.0, %v604
        %v606 = vpop.f32.mrf.mxu0
        %v607 = vadd.f32 0.0, %v606
        %v608 = vpop.f32.mrf.mxu0
        %v609 = vadd.f32 0.0, %v608
        %v610 = vpop.f32.mrf.mxu0
        %v611 = vadd.f32 0.0, %v610
        %612 = vmatprep.mubr.bf16.mxu0 0
        %613 = vmatmul.mubr.bf16.gmra.mxu0 %v484
        %v614 = vpop.f32.mrf.mxu0
        %v615 = vadd.f32 0.0, %v614
        %v616 = vpop.f32.mrf.mxu0
        %v617 = vadd.f32 0.0, %v616
        %v618 = vpop.f32.mrf.mxu0
        %v619 = vadd.f32 0.0, %v618
        %v620 = vpop.f32.mrf.mxu0
        %v621 = vadd.f32 0.0, %v620
        %622 = vmatprep.mubr.bf16.mxu0 0
        %623 = vmatmul.mubr.bf16.gmra.mxu0 %v487
        %v624 = vpop.f32.mrf.mxu0
        %v625 = vadd.f32 0.0, %v624
        %v626 = vpop.f32.mrf.mxu0
        %v627 = vadd.f32 0.0, %v626
        %v628 = vpop.f32.mrf.mxu0
        %v629 = vadd.f32 0.0, %v628
        %v630 = vpop.f32.mrf.mxu0
        %v631 = vadd.f32 0.0, %v630
        %632 = vmatprep.mubr.bf16.mxu0 0
        %633 = vmatmul.mubr.bf16.gmra.mxu0 %v490
        %v634 = vpop.f32.mrf.mxu0
        %v635 = vadd.f32 0.0, %v634
        %v636 = vpop.f32.mrf.mxu0
        %v637 = vadd.f32 0.0, %v636
        %v638 = vpop.f32.mrf.mxu0
        %v639 = vadd.f32 0.0, %v638
        %v640 = vpop.f32.mrf.mxu0
        %v641 = vadd.f32 0.0, %v640
        %642 = vmatprep.mubr.bf16.mxu0 0
        %643 = vmatmul.mubr.bf16.gmra.mxu0 %v493
        %v644 = vpop.f32.mrf.mxu0
        %v645 = vadd.f32 0.0, %v644
        %v646 = vpop.f32.mrf.mxu0
        %v647 = vadd.f32 0.0, %v646
        %v648 = vpop.f32.mrf.mxu0
        %v649 = vadd.f32 0.0, %v648
        %v650 = vpop.f32.mrf.mxu0
        %v651 = vadd.f32 0.0, %v650
        %652 = vmatprep.mubr.bf16.mxu0 0
        %653 = vmatmul.mubr.bf16.gmra.mxu0 %v496
        %v654 = vpop.f32.mrf.mxu0
        %v655 = vadd.f32 0.0, %v654
        %v656 = vpop.f32.mrf.mxu0
        %v657 = vadd.f32 0.0, %v656
        %v658 = vpop.f32.mrf.mxu0
        %v659 = vadd.f32 0.0, %v658
        %v660 = vpop.f32.mrf.mxu0
        %v661 = vadd.f32 0.0, %v660
        %662 = vmatprep.mubr.bf16.mxu0 0
        %663 = vmatmul.mubr.bf16.gmra.mxu0 %v499
        %v664 = vpop.f32.mrf.mxu0
        %v665 = vadd.f32 0.0, %v664
        %v666 = vpop.f32.mrf.mxu0
        %v667 = vadd.f32 0.0, %v666
        %v668 = vpop.f32.mrf.mxu0
        %v669 = vadd.f32 0.0, %v668
        %v670 = vpop.f32.mrf.mxu0
        %v671 = vadd.f32 0.0, %v670
        %672 = vmatprep.mubr.bf16.mxu0 0
        %673 = vmatmul.mubr.bf16.gmra.mxu0 %v502
        %v674 = vpop.f32.mrf.mxu0
        %v675 = vadd.f32 0.0, %v674
        %v676 = vpop.f32.mrf.mxu0
        %v677 = vadd.f32 0.0, %v676
        %v678 = vpop.f32.mrf.mxu0
        %v679 = vadd.f32 0.0, %v678
        %v680 = vpop.f32.mrf.mxu0
        %v681 = vadd.f32 0.0, %v680
        %682 = vmatprep.mubr.bf16.mxu0 0
        %683 = vmatmul.mubr.bf16.gmra.mxu0 %v505
        %v684 = vpop.f32.mrf.mxu0
        %v685 = vadd.f32 0.0, %v684
        %v686 = vpop.f32.mrf.mxu0
        %v687 = vadd.f32 0.0, %v686
        %v688 = vpop.f32.mrf.mxu0
        %v689 = vadd.f32 0.0, %v688
        %v690 = vpop.f32.mrf.mxu0
        %v691 = vadd.f32 0.0, %v690
        %692 = vmatprep.mubr.bf16.mxu0 0
        %693 = vmatmul.mubr.bf16.gmra.mxu0 %v508
        %v694 = vpop.f32.mrf.mxu0
        %v695 = vadd.f32 0.0, %v694
        %v696 = vpop.f32.mrf.mxu0
        %v697 = vadd.f32 0.0, %v696
        %v698 = vpop.f32.mrf.mxu0
        %v699 = vadd.f32 0.0, %v698
        %v700 = vpop.f32.mrf.mxu0
        %v701 = vadd.f32 0.0, %v700
        %702 = vmatprep.mubr.bf16.mxu0 0
        %703 = vmatmul.mubr.bf16.gmra.mxu0 %v511
        %v704 = vpop.f32.mrf.mxu0
        %v705 = vadd.f32 0.0, %v704
        %v706 = vpop.f32.mrf.mxu0
        %v707 = vadd.f32 0.0, %v706
        %v708 = vpop.f32.mrf.mxu0
        %v709 = vadd.f32 0.0, %v708
        %v710 = vpop.f32.mrf.mxu0
        %v711 = vadd.f32 0.0, %v710
        %712 = vdwg.mxu0
        %v716 = vunpack.c.l.b16 %v455
        %v717 = vunpack.c.h.b16 %v455
        %v718 = vunpack.c.l.b16 %v456
        %v719 = vunpack.c.h.b16 %v456
        %v720 = vunpack.c.l.b16 %v457
        %v721 = vunpack.c.h.b16 %v457
        %v722 = vpack.c.b16 %v718, %v716
        %v723 = vpack.c.b16 %v719, %v717
        %v724 = vpack.c.b16 %v720, %v720
        %v725 = vpack.c.b16 %v721, %v721
        %vm728 = vcmask 195584
        %v730 = vsel %vm728, %v391, 0
        %v733 = vsel %vm728, %v392, 0
        %v736 = vsel %vm728, %v393, 0
        %v739 = vsel %vm728, %v394, 0
        %v742 = vsel %vm728, %v395, 0
        %v745 = vsel %vm728, %v396, 0
        %v748 = vsel %vm728, %v397, 0
        %v751 = vsel %vm728, %v398, 0
        %v754 = vsel %vm728, %v399, 0
        %v757 = vsel %vm728, %v400, 0
        %v760 = vsel %vm728, %v401, 0
        %v763 = vsel %vm728, %v402, 0
        %v766 = vsel %vm728, %v403, 0
        %v769 = vsel %vm728, %v404, 0
        %v772 = vsel %vm728, %v405, 0
        %v775 = vsel %vm728, %v406, 0
        %v778 = vsel %vm513, %v724, 0
        %v781 = vsel %vm513, %v725, 0
        %783 = vmatprep.subr.bf16.mxu0 0
        %784 = vmatpush1.bf16.msra.mxu0 0
        %785 = vmatprep.subr.bf16.mxu0 0
        %786 = vmatpush1.bf16.msra.mxu0 0
        %787 = vmatprep.subr.bf16.mxu0 0
        %788 = vmatpush1.bf16.msra.mxu0 0
        %789 = vmatprep.subr.bf16.mxu0 0
        %790 = vmatpush1.bf16.msra.mxu0 0
        %791 = vmatprep.subr.bf16.mxu0 0
        %792 = vmatpush1.bf16.msra.mxu0 0
        %793 = vmatprep.subr.bf16.mxu0 0
        %794 = vmatpush1.bf16.msra.mxu0 0
        %795 = vmatprep.subr.bf16.mxu0 %v781
        %796 = vmatpush1.bf16.msra.mxu0 %v778
        %797 = vmatprep.subr.bf16.mxu0 %v723
        %798 = vmatpush1.bf16.msra.mxu0 %v722
        %799 = vmatprep.subr.bf16.mxu0 0
        %800 = vmatpush2.bf16.msra.mxu0 0
        %801 = vmatprep.subr.bf16.mxu0 0
        %802 = vmatpush2.bf16.msra.mxu0 0
        %803 = vmatprep.subr.bf16.mxu0 0
        %804 = vmatpush2.bf16.msra.mxu0 0
        %805 = vmatprep.subr.bf16.mxu0 0
        %806 = vmatpush2.bf16.msra.mxu0 0
        %807 = vmatprep.subr.bf16.mxu0 0
        %808 = vmatpush2.bf16.msra.mxu0 0
        %809 = vmatprep.subr.bf16.mxu0 0
        %810 = vmatpush2.bf16.msra.mxu0 0
        %811 = vmatprep.subr.bf16.mxu0 0
        %812 = vmatpush2.bf16.msra.mxu0 0
        %813 = vmatprep.subr.bf16.mxu0 0
        %814 = vmatpush2.bf16.msra.mxu0 0
        %815 = vmatprep.mubr.bf16.mxu0 0
        %816 = vmatmul.mubr.bf16.gmra.mxu0 %v730
        %v817 = vpop.f32.mrf.mxu0
        %v818 = vadd.f32 %v555, %v817
        %v819 = vpop.f32.mrf.mxu0
        %v820 = vadd.f32 %v557, %v819
        %v821 = vpop.f32.mrf.mxu0
        %v822 = vadd.f32 %v559, %v821
        %v823 = vpop.f32.mrf.mxu0
        %v824 = vadd.f32 %v561, %v823
        %825 = vmatprep.mubr.bf16.mxu0 0
        %826 = vmatmul.mubr.bf16.gmra.mxu0 %v733
        %v827 = vpop.f32.mrf.mxu0
        %v828 = vadd.f32 %v565, %v827
        %v829 = vpop.f32.mrf.mxu0
        %v830 = vadd.f32 %v567, %v829
        %v831 = vpop.f32.mrf.mxu0
        %v832 = vadd.f32 %v569, %v831
        %v833 = vpop.f32.mrf.mxu0
        %v834 = vadd.f32 %v571, %v833
        %835 = vmatprep.mubr.bf16.mxu0 0
        %836 = vmatmul.mubr.bf16.gmra.mxu0 %v736
        %v837 = vpop.f32.mrf.mxu0
        %v838 = vadd.f32 %v575, %v837
        %v839 = vpop.f32.mrf.mxu0
        %v840 = vadd.f32 %v577, %v839
        %v841 = vpop.f32.mrf.mxu0
        %v842 = vadd.f32 %v579, %v841
        %v843 = vpop.f32.mrf.mxu0
        %v844 = vadd.f32 %v581, %v843
        %845 = vmatprep.mubr.bf16.mxu0 0
        %846 = vmatmul.mubr.bf16.gmra.mxu0 %v739
        %v847 = vpop.f32.mrf.mxu0
        %v848 = vadd.f32 %v585, %v847
        %v849 = vpop.f32.mrf.mxu0
        %v850 = vadd.f32 %v587, %v849
        %v851 = vpop.f32.mrf.mxu0
        %v852 = vadd.f32 %v589, %v851
        %v853 = vpop.f32.mrf.mxu0
        %v854 = vadd.f32 %v591, %v853
        %855 = vmatprep.mubr.bf16.mxu0 0
        %856 = vmatmul.mubr.bf16.gmra.mxu0 %v742
        %v857 = vpop.f32.mrf.mxu0
        %v858 = vadd.f32 %v595, %v857
        %v859 = vpop.f32.mrf.mxu0
        %v860 = vadd.f32 %v597, %v859
        %v861 = vpop.f32.mrf.mxu0
        %v862 = vadd.f32 %v599, %v861
        %v863 = vpop.f32.mrf.mxu0
        %v864 = vadd.f32 %v601, %v863
        %865 = vmatprep.mubr.bf16.mxu0 0
        %866 = vmatmul.mubr.bf16.gmra.mxu0 %v745
        %v867 = vpop.f32.mrf.mxu0
        %v868 = vadd.f32 %v605, %v867
        %v869 = vpop.f32.mrf.mxu0
        %v870 = vadd.f32 %v607, %v869
        %v871 = vpop.f32.mrf.mxu0
        %v872 = vadd.f32 %v609, %v871
        %v873 = vpop.f32.mrf.mxu0
        %v874 = vadd.f32 %v611, %v873
        %875 = vmatprep.mubr.bf16.mxu0 0
        %876 = vmatmul.mubr.bf16.gmra.mxu0 %v748
        %v877 = vpop.f32.mrf.mxu0
        %v878 = vadd.f32 %v615, %v877
        %v879 = vpop.f32.mrf.mxu0
        %v880 = vadd.f32 %v617, %v879
        %v881 = vpop.f32.mrf.mxu0
        %v882 = vadd.f32 %v619, %v881
        %v883 = vpop.f32.mrf.mxu0
        %v884 = vadd.f32 %v621, %v883
        %885 = vmatprep.mubr.bf16.mxu0 0
        %886 = vmatmul.mubr.bf16.gmra.mxu0 %v751
        %v887 = vpop.f32.mrf.mxu0
        %v888 = vadd.f32 %v625, %v887
        %v889 = vpop.f32.mrf.mxu0
        %v890 = vadd.f32 %v627, %v889
        %v891 = vpop.f32.mrf.mxu0
        %v892 = vadd.f32 %v629, %v891
        %v893 = vpop.f32.mrf.mxu0
        %v894 = vadd.f32 %v631, %v893
        %895 = vmatprep.mubr.bf16.mxu0 0
        %896 = vmatmul.mubr.bf16.gmra.mxu0 %v754
        %v897 = vpop.f32.mrf.mxu0
        %v898 = vadd.f32 %v635, %v897
        %v899 = vpop.f32.mrf.mxu0
        %v900 = vadd.f32 %v637, %v899
        %v901 = vpop.f32.mrf.mxu0
        %v902 = vadd.f32 %v639, %v901
        %v903 = vpop.f32.mrf.mxu0
        %v904 = vadd.f32 %v641, %v903
        %905 = vmatprep.mubr.bf16.mxu0 0
        %906 = vmatmul.mubr.bf16.gmra.mxu0 %v757
        %v907 = vpop.f32.mrf.mxu0
        %v908 = vadd.f32 %v645, %v907
        %v909 = vpop.f32.mrf.mxu0
        %v910 = vadd.f32 %v647, %v909
        %v911 = vpop.f32.mrf.mxu0
        %v912 = vadd.f32 %v649, %v911
        %v913 = vpop.f32.mrf.mxu0
        %v914 = vadd.f32 %v651, %v913
        %915 = vmatprep.mubr.bf16.mxu0 0
        %916 = vmatmul.mubr.bf16.gmra.mxu0 %v760
        %v917 = vpop.f32.mrf.mxu0
        %v918 = vadd.f32 %v655, %v917
        %v919 = vpop.f32.mrf.mxu0
        %v920 = vadd.f32 %v657, %v919
        %v921 = vpop.f32.mrf.mxu0
        %v922 = vadd.f32 %v659, %v921
        %v923 = vpop.f32.mrf.mxu0
        %v924 = vadd.f32 %v661, %v923
        %925 = vmatprep.mubr.bf16.mxu0 0
        %926 = vmatmul.mubr.bf16.gmra.mxu0 %v763
        %v927 = vpop.f32.mrf.mxu0
        %v928 = vadd.f32 %v665, %v927
        %v929 = vpop.f32.mrf.mxu0
        %v930 = vadd.f32 %v667, %v929
        %v931 = vpop.f32.mrf.mxu0
        %v932 = vadd.f32 %v669, %v931
        %v933 = vpop.f32.mrf.mxu0
        %v934 = vadd.f32 %v671, %v933
        %935 = vmatprep.mubr.bf16.mxu0 0
        %936 = vmatmul.mubr.bf16.gmra.mxu0 %v766
        %v937 = vpop.f32.mrf.mxu0
        %v938 = vadd.f32 %v675, %v937
        %v939 = vpop.f32.mrf.mxu0
        %v940 = vadd.f32 %v677, %v939
        %v941 = vpop.f32.mrf.mxu0
        %v942 = vadd.f32 %v679, %v941
        %v943 = vpop.f32.mrf.mxu0
        %v944 = vadd.f32 %v681, %v943
        %945 = vmatprep.mubr.bf16.mxu0 0
        %946 = vmatmul.mubr.bf16.gmra.mxu0 %v769
        %v947 = vpop.f32.mrf.mxu0
        %v948 = vadd.f32 %v685, %v947
        %v949 = vpop.f32.mrf.mxu0
        %v950 = vadd.f32 %v687, %v949
        %v951 = vpop.f32.mrf.mxu0
        %v952 = vadd.f32 %v689, %v951
        %v953 = vpop.f32.mrf.mxu0
        %v954 = vadd.f32 %v691, %v953
        %955 = vmatprep.mubr.bf16.mxu0 0
        %956 = vmatmul.mubr.bf16.gmra.mxu0 %v772
        %v957 = vpop.f32.mrf.mxu0
        %v958 = vadd.f32 %v695, %v957
        %v959 = vpop.f32.mrf.mxu0
        %v960 = vadd.f32 %v697, %v959
        %v961 = vpop.f32.mrf.mxu0
        %v962 = vadd.f32 %v699, %v961
        %v963 = vpop.f32.mrf.mxu0
        %v964 = vadd.f32 %v701, %v963
        %965 = vmatprep.mubr.bf16.mxu0 0
        %966 = vmatmul.mubr.bf16.gmra.mxu0 %v775
        %v967 = vpop.f32.mrf.mxu0
        %v968 = vadd.f32 %v705, %v967
        %v969 = vpop.f32.mrf.mxu0
        %v970 = vadd.f32 %v707, %v969
        %v971 = vpop.f32.mrf.mxu0
        %v972 = vadd.f32 %v709, %v971
        %v973 = vpop.f32.mrf.mxu0
        %v974 = vadd.f32 %v711, %v973
        %975 = vdwg.mxu0
        %v976 = vld [vmem:[%s4] sm:$0x3]
        %v978 = vlaneseq
        %v979 = vshrl.u32 %v978, 7
        %v980 = vsub.s32 0, %v979
        %v981 = vrot.slane %v976, %v980
        %v982 = vlaneseq
        %v983 = vshrl.u32 %v982, 7
        %v984 = vsub.s32 1, %v983
        %v985 = vrot.slane %v976, %v984
        %v988 = vadd.f32 %v818, %v981
        %v989 = vadd.f32 %v820, %v985
        %v990 = vadd.f32 %v822, %v981
        %v991 = vadd.f32 %v824, %v985
        %v992 = vadd.f32 %v828, %v981
        %v993 = vadd.f32 %v830, %v985
        %v994 = vadd.f32 %v832, %v981
        %v995 = vadd.f32 %v834, %v985
        %v996 = vadd.f32 %v838, %v981
        %v997 = vadd.f32 %v840, %v985
        %v998 = vadd.f32 %v842, %v981
        %v999 = vadd.f32 %v844, %v985
        %v1000 = vadd.f32 %v848, %v981
        %v1001 = vadd.f32 %v850, %v985
        %v1002 = vadd.f32 %v852, %v981
        %v1003 = vadd.f32 %v854, %v985
        %v1004 = vadd.f32 %v858, %v981
        %v1005 = vadd.f32 %v860, %v985
        %v1006 = vadd.f32 %v862, %v981
        %v1007 = vadd.f32 %v864, %v985
        %v1008 = vadd.f32 %v868, %v981
        %v1009 = vadd.f32 %v870, %v985
        %v1010 = vadd.f32 %v872, %v981
        %v1011 = vadd.f32 %v874, %v985
        %v1012 = vadd.f32 %v878, %v981
        %v1013 = vadd.f32 %v880, %v985
        %v1014 = vadd.f32 %v882, %v981
        %v1015 = vadd.f32 %v884, %v985
        %v1016 = vadd.f32 %v888, %v981
        %v1017 = vadd.f32 %v890, %v985
        %v1018 = vadd.f32 %v892, %v981
        %v1019 = vadd.f32 %v894, %v985
        %v1020 = vadd.f32 %v898, %v981
        %v1021 = vadd.f32 %v900, %v985
        %v1022 = vadd.f32 %v902, %v981
        %v1023 = vadd.f32 %v904, %v985
        %v1024 = vadd.f32 %v908, %v981
        %v1025 = vadd.f32 %v910, %v985
        %v1026 = vadd.f32 %v912, %v981
        %v1027 = vadd.f32 %v914, %v985
        %v1028 = vadd.f32 %v918, %v981
        %v1029 = vadd.f32 %v920, %v985
        %v1030 = vadd.f32 %v922, %v981
        %v1031 = vadd.f32 %v924, %v985
        %v1032 = vadd.f32 %v928, %v981
        %v1033 = vadd.f32 %v930, %v985
        %v1034 = vadd.f32 %v932, %v981
        %v1035 = vadd.f32 %v934, %v985
        %v1036 = vadd.f32 %v938, %v981
        %v1037 = vadd.f32 %v940, %v985
        %v1038 = vadd.f32 %v942, %v981
        %v1039 = vadd.f32 %v944, %v985
        %v1040 = vadd.f32 %v948, %v981
        %v1041 = vadd.f32 %v950, %v985
        %v1042 = vadd.f32 %v952, %v981
        %v1043 = vadd.f32 %v954, %v985
        %v1044 = vadd.f32 %v958, %v981
        %v1045 = vadd.f32 %v960, %v985
        %v1046 = vadd.f32 %v962, %v981
        %v1047 = vadd.f32 %v964, %v985
        %v1048 = vadd.f32 %v968, %v981
        %v1049 = vadd.f32 %v970, %v985
        %v1050 = vadd.f32 %v972, %v981
        %v1051 = vadd.f32 %v974, %v985
        %v1052 = vmax.f32 %v988, 0.0
        %v1053 = vmax.f32 %v989, 0.0
        %v1054 = vmax.f32 %v990, 0.0
        %v1055 = vmax.f32 %v991, 0.0
        %v1056 = vmax.f32 %v992, 0.0
        %v1057 = vmax.f32 %v993, 0.0
        %v1058 = vmax.f32 %v994, 0.0
        %v1059 = vmax.f32 %v995, 0.0
        %v1060 = vmax.f32 %v996, 0.0
        %v1061 = vmax.f32 %v997, 0.0
        %v1062 = vmax.f32 %v998, 0.0
        %v1063 = vmax.f32 %v999, 0.0
        %v1064 = vmax.f32 %v1000, 0.0
        %v1065 = vmax.f32 %v1001, 0.0
        %v1066 = vmax.f32 %v1002, 0.0
        %v1067 = vmax.f32 %v1003, 0.0
        %v1068 = vmax.f32 %v1004, 0.0
        %v1069 = vmax.f32 %v1005, 0.0
        %v1070 = vmax.f32 %v1006, 0.0
        %v1071 = vmax.f32 %v1007, 0.0
        %v1072 = vmax.f32 %v1008, 0.0
        %v1073 = vmax.f32 %v1009, 0.0
        %v1074 = vmax.f32 %v1010, 0.0
        %v1075 = vmax.f32 %v1011, 0.0
        %v1076 = vmax.f32 %v1012, 0.0
        %v1077 = vmax.f32 %v1013, 0.0
        %v1078 = vmax.f32 %v1014, 0.0
        %v1079 = vmax.f32 %v1015, 0.0
        %v1080 = vmax.f32 %v1016, 0.0
        %v1081 = vmax.f32 %v1017, 0.0
        %v1082 = vmax.f32 %v1018, 0.0
        %v1083 = vmax.f32 %v1019, 0.0
        %v1084 = vmax.f32 %v1020, 0.0
        %v1085 = vmax.f32 %v1021, 0.0
        %v1086 = vmax.f32 %v1022, 0.0
        %v1087 = vmax.f32 %v1023, 0.0
        %v1088 = vmax.f32 %v1024, 0.0
        %v1089 = vmax.f32 %v1025, 0.0
        %v1090 = vmax.f32 %v1026, 0.0
        %v1091 = vmax.f32 %v1027, 0.0
        %v1092 = vmax.f32 %v1028, 0.0
        %v1093 = vmax.f32 %v1029, 0.0
        %v1094 = vmax.f32 %v1030, 0.0
        %v1095 = vmax.f32 %v1031, 0.0
        %v1096 = vmax.f32 %v1032, 0.0
        %v1097 = vmax.f32 %v1033, 0.0
        %v1098 = vmax.f32 %v1034, 0.0
        %v1099 = vmax.f32 %v1035, 0.0
        %v1100 = vmax.f32 %v1036, 0.0
        %v1101 = vmax.f32 %v1037, 0.0
        %v1102 = vmax.f32 %v1038, 0.0
        %v1103 = vmax.f32 %v1039, 0.0
        %v1104 = vmax.f32 %v1040, 0.0
        %v1105 = vmax.f32 %v1041, 0.0
        %v1106 = vmax.f32 %v1042, 0.0
        %v1107 = vmax.f32 %v1043, 0.0
        %v1108 = vmax.f32 %v1044, 0.0
        %v1109 = vmax.f32 %v1045, 0.0
        %v1110 = vmax.f32 %v1046, 0.0
        %v1111 = vmax.f32 %v1047, 0.0
        %v1112 = vmax.f32 %v1048, 0.0
        %v1113 = vmax.f32 %v1049, 0.0
        %v1114 = vmax.f32 %v1050, 0.0
        %v1115 = vmax.f32 %v1051, 0.0
        %v1116 = vpack.c.bf16 %v1054, %v1052
        %v1117 = vpack.c.bf16 %v1055, %v1053
        %v1118 = vpack.c.bf16 %v1058, %v1056
        %v1119 = vpack.c.bf16 %v1059, %v1057
        %v1120 = vpack.c.bf16 %v1062, %v1060
        %v1121 = vpack.c.bf16 %v1063, %v1061
        %v1122 = vpack.c.bf16 %v1066, %v1064
        %v1123 = vpack.c.bf16 %v1067, %v1065
        %v1124 = vpack.c.bf16 %v1070, %v1068
        %v1125 = vpack.c.bf16 %v1071, %v1069
        %v1126 = vpack.c.bf16 %v1074, %v1072
        %v1127 = vpack.c.bf16 %v1075, %v1073
        %v1128 = vpack.c.bf16 %v1078, %v1076
        %v1129 = vpack.c.bf16 %v1079, %v1077
        %v1130 = vpack.c.bf16 %v1082, %v1080
        %v1131 = vpack.c.bf16 %v1083, %v1081
        %v1132 = vpack.c.bf16 %v1086, %v1084
        %v1133 = vpack.c.bf16 %v1087, %v1085
        %v1134 = vpack.c.bf16 %v1090, %v1088
        %v1135 = vpack.c.bf16 %v1091, %v1089
        %v1136 = vpack.c.bf16 %v1094, %v1092
        %v1137 = vpack.c.bf16 %v1095, %v1093
        %v1138 = vpack.c.bf16 %v1098, %v1096
        %v1139 = vpack.c.bf16 %v1099, %v1097
        %v1140 = vpack.c.bf16 %v1102, %v1100
        %v1141 = vpack.c.bf16 %v1103, %v1101
        %v1142 = vpack.c.bf16 %v1106, %v1104
        %v1143 = vpack.c.bf16 %v1107, %v1105
        %v1144 = vpack.c.bf16 %v1110, %v1108
        %v1145 = vpack.c.bf16 %v1111, %v1109
        %v1146 = vpack.c.bf16 %v1114, %v1112
        %v1147 = vpack.c.bf16 %v1115, %v1113
        %v1148 = vld [vmem:[%s5] sm:$0xff]
        %v1149 = vld [vmem:[%s5 + $0x8] sm:$0xff]
        %v1150 = vld [vmem:[%s5 + $0x10] sm:$0xff]
        %v1151 = vld [vmem:[%s5 + $0x18] sm:$0xff]
        %v1152 = vld [vmem:[%s5 + $0x20] sm:$0xff]
        %v1153 = vld [vmem:[%s5 + $0x28] sm:$0xff]
        %v1154 = vld [vmem:[%s5 + $0x30] sm:$0xff]
        %v1155 = vld [vmem:[%s5 + $0x38] sm:$0xff]
        %v1156 = vld [vmem:[%s5 + $0x40] sm:$0xff]
        %v1157 = vld [vmem:[%s5 + $0x48] sm:$0xff]
        %v1158 = vld [vmem:[%s5 + $0x50] sm:$0xff]
        %v1159 = vld [vmem:[%s5 + $0x58] sm:$0xff]
        %v1160 = vld [vmem:[%s5 + $0x60] sm:$0xff]
        %v1161 = vld [vmem:[%s5 + $0x68] sm:$0xff]
        %v1162 = vld [vmem:[%s5 + $0x70] sm:$0xff]
        %v1163 = vld [vmem:[%s5 + $0x78] sm:$0xff]
        %v1164 = vld [vmem:[%s5 + $0x80] sm:$0xff]
        %v1165 = vld [vmem:[%s5 + $0x88] sm:$0xff]
        %v1166 = vld [vmem:[%s5 + $0x90] sm:$0xff]
        %v1167 = vld [vmem:[%s5 + $0x98] sm:$0xff]
        %v1168 = vld [vmem:[%s5 + $0xa0] sm:$0xff]
        %v1169 = vld [vmem:[%s5 + $0xa8] sm:$0xff]
        %v1170 = vld [vmem:[%s5 + $0xb0] sm:$0xff]
        %v1171 = vld [vmem:[%s5 + $0xb8] sm:$0xff]
        %v1172 = vld [vmem:[%s5 + $0xc0] sm:$0xff]
        %v1173 = vld [vmem:[%s5 + $0xc8] sm:$0xff]
        %v1174 = vld [vmem:[%s5 + $0xd0] sm:$0xff]
        %v1175 = vld [vmem:[%s5 + $0xd8] sm:$0xff]
        %v1176 = vld [vmem:[%s5 + $0xe0] sm:$0xff]
        %v1177 = vld [vmem:[%s5 + $0xe8] sm:$0xff]
        %v1178 = vld [vmem:[%s5 + $0xf0] sm:$0xff]
        %v1179 = vld [vmem:[%s5 + $0xf8] sm:$0xff]
        %v1180 = vld [vmem:[%s6] sm:$0x3]
        %v1182 = vlaneseq
        %v1183 = vshrl.u32 %v1182, 7
        %v1184 = vsub.s32 0, %v1183
        %v1185 = vrot.slane %v1180, %v1184
        %v1186 = vlaneseq
        %v1187 = vshrl.u32 %v1186, 7
        %v1188 = vsub.s32 1, %v1187
        %v1189 = vrot.slane %v1180, %v1188
        %v1224 = vunpack.c.l.b16 %v1148
        %v1225 = vunpack.c.h.b16 %v1148
        %v1226 = vunpack.c.l.b16 %v1149
        %v1227 = vunpack.c.h.b16 %v1149
        %v1228 = vunpack.c.l.b16 %v1150
        %v1229 = vunpack.c.h.b16 %v1150
        %v1230 = vunpack.c.l.b16 %v1151
        %v1231 = vunpack.c.h.b16 %v1151
        %v1232 = vunpack.c.l.b16 %v1152
        %v1233 = vunpack.c.h.b16 %v1152
        %v1234 = vunpack.c.l.b16 %v1153
        %v1235 = vunpack.c.h.b16 %v1153
        %v1236 = vunpack.c.l.b16 %v1154
        %v1237 = vunpack.c.h.b16 %v1154
        %v1238 = vunpack.c.l.b16 %v1155
        %v1239 = vunpack.c.h.b16 %v1155
        %v1240 = vunpack.c.l.b16 %v1156
        %v1241 = vunpack.c.h.b16 %v1156
        %v1242 = vunpack.c.l.b16 %v1157
        %v1243 = vunpack.c.h.b16 %v1157
        %v1244 = vunpack.c.l.b16 %v1158
        %v1245 = vunpack.c.h.b16 %v1158
        %v1246 = vunpack.c.l.b16 %v1159
        %v1247 = vunpack.c.h.b16 %v1159
        %v1248 = vunpack.c.l.b16 %v1160
        %v1249 = vunpack.c.h.b16 %v1160
        %v1250 = vunpack.c.l.b16 %v1161
        %v1251 = vunpack.c.h.b16 %v1161
        %v1252 = vunpack.c.l.b16 %v1162
        %v1253 = vunpack.c.h.b16 %v1162
        %v1254 = vunpack.c.l.b16 %v1163
        %v1255 = vunpack.c.h.b16 %v1163
        %v1256 = vunpack.c.l.b16 %v1164
        %v1257 = vunpack.c.h.b16 %v1164
        %v1258 = vunpack.c.l.b16 %v1165
        %v1259 = vunpack.c.h.b16 %v1165
        %v1260 = vunpack.c.l.b16 %v1166
        %v1261 = vunpack.c.h.b16 %v1166
        %v1262 = vunpack.c.l.b16 %v1167
        %v1263 = vunpack.c.h.b16 %v1167
        %v1264 = vunpack.c.l.b16 %v1168
        %v1265 = vunpack.c.h.b16 %v1168
        %v1266 = vunpack.c.l.b16 %v1169
        %v1267 = vunpack.c.h.b16 %v1169
        %v1268 = vunpack.c.l.b16 %v1170
        %v1269 = vunpack.c.h.b16 %v1170
        %v1270 = vunpack.c.l.b16 %v1171
        %v1271 = vunpack.c.h.b16 %v1171
        %v1272 = vunpack.c.l.b16 %v1172
        %v1273 = vunpack.c.h.b16 %v1172
        %v1274 = vunpack.c.l.b16 %v1173
        %v1275 = vunpack.c.h.b16 %v1173
        %v1276 = vunpack.c.l.b16 %v1174
        %v1277 = vunpack.c.h.b16 %v1174
        %v1278 = vunpack.c.l.b16 %v1175
        %v1279 = vunpack.c.h.b16 %v1175
        %v1280 = vunpack.c.l.b16 %v1176
        %v1281 = vunpack.c.h.b16 %v1176
        %v1282 = vunpack.c.l.b16 %v1177
        %v1283 = vunpack.c.h.b16 %v1177
        %v1284 = vunpack.c.l.b16 %v1178
        %v1285 = vunpack.c.h.b16 %v1178
        %v1286 = vunpack.c.l.b16 %v1179
        %v1287 = vunpack.c.h.b16 %v1179
        %v1288 = vpack.c.b16 %v1226, %v1224
        %v1289 = vpack.c.b16 %v1227, %v1225
        %v1290 = vpack.c.b16 %v1230, %v1228
        %v1291 = vpack.c.b16 %v1231, %v1229
        %v1292 = vpack.c.b16 %v1234, %v1232
        %v1293 = vpack.c.b16 %v1235, %v1233
        %v1294 = vpack.c.b16 %v1238, %v1236
        %v1295 = vpack.c.b16 %v1239, %v1237
        %v1296 = vpack.c.b16 %v1242, %v1240
        %v1297 = vpack.c.b16 %v1243, %v1241
        %v1298 = vpack.c.b16 %v1246, %v1244
        %v1299 = vpack.c.b16 %v1247, %v1245
        %v1300 = vpack.c.b16 %v1250, %v1248
        %v1301 = vpack.c.b16 %v1251, %v1249
        %v1302 = vpack.c.b16 %v1254, %v1252
        %v1303 = vpack.c.b16 %v1255, %v1253
        %v1304 = vpack.c.b16 %v1258, %v1256
        %v1305 = vpack.c.b16 %v1259, %v1257
        %v1306 = vpack.c.b16 %v1262, %v1260
        %v1307 = vpack.c.b16 %v1263, %v1261
        %v1308 = vpack.c.b16 %v1266, %v1264
        %v1309 = vpack.c.b16 %v1267, %v1265
        %v1310 = vpack.c.b16 %v1270, %v1268
        %v1311 = vpack.c.b16 %v1271, %v1269
        %v1312 = vpack.c.b16 %v1274, %v1272
        %v1313 = vpack.c.b16 %v1275, %v1273
        %v1314 = vpack.c.b16 %v1278, %v1276
        %v1315 = vpack.c.b16 %v1279, %v1277
        %v1316 = vpack.c.b16 %v1282, %v1280
        %v1317 = vpack.c.b16 %v1283, %v1281
        %v1318 = vpack.c.b16 %v1286, %v1284
        %v1319 = vpack.c.b16 %v1287, %v1285
        %1352 = vmatprep.subr.bf16.mxu0 %v1303
        %1353 = vmatpush1.bf16.msra.mxu0 %v1302
        %1354 = vmatprep.subr.bf16.mxu0 %v1301
        %1355 = vmatpush1.bf16.msra.mxu0 %v1300
        %1356 = vmatprep.subr.bf16.mxu0 %v1299
        %1357 = vmatpush1.bf16.msra.mxu0 %v1298
        %1358 = vmatprep.subr.bf16.mxu0 %v1297
        %1359 = vmatpush1.bf16.msra.mxu0 %v1296
        %1360 = vmatprep.subr.bf16.mxu0 %v1295
        %1361 = vmatpush1.bf16.msra.mxu0 %v1294
        %1362 = vmatprep.subr.bf16.mxu0 %v1293
        %1363 = vmatpush1.bf16.msra.mxu0 %v1292
        %1364 = vmatprep.subr.bf16.mxu0 %v1291
        %1365 = vmatpush1.bf16.msra.mxu0 %v1290
        %1366 = vmatprep.subr.bf16.mxu0 %v1289
        %1367 = vmatpush1.bf16.msra.mxu0 %v1288
        %1368 = vmatprep.subr.bf16.mxu0 %v1319
        %1369 = vmatpush2.bf16.msra.mxu0 %v1318
        %1370 = vmatprep.subr.bf16.mxu0 %v1317
        %1371 = vmatpush2.bf16.msra.mxu0 %v1316
        %1372 = vmatprep.subr.bf16.mxu0 %v1315
        %1373 = vmatpush2.bf16.msra.mxu0 %v1314
        %1374 = vmatprep.subr.bf16.mxu0 %v1313
        %1375 = vmatpush2.bf16.msra.mxu0 %v1312
        %1376 = vmatprep.subr.bf16.mxu0 %v1311
        %1377 = vmatpush2.bf16.msra.mxu0 %v1310
        %1378 = vmatprep.subr.bf16.mxu0 %v1309
        %1379 = vmatpush2.bf16.msra.mxu0 %v1308
        %1380 = vmatprep.subr.bf16.mxu0 %v1307
        %1381 = vmatpush2.bf16.msra.mxu0 %v1306
        %1382 = vmatprep.subr.bf16.mxu0 %v1305
        %1383 = vmatpush2.bf16.msra.mxu0 %v1304
        %1384 = vmatprep.mubr.bf16.mxu0 %v1117
        %1385 = vmatmul.mubr.bf16.gmra.mxu0 %v1116
        %v1386 = vpop.f32.mrf.mxu0
        %v1387 = vadd.f32 %v1185, %v1386
        %v1388 = vpop.f32.mrf.mxu0
        %v1389 = vadd.f32 %v1189, %v1388
        %v1390 = vpop.f32.mrf.mxu0
        %v1391 = vadd.f32 %v1185, %v1390
        %v1392 = vpop.f32.mrf.mxu0
        %v1393 = vadd.f32 %v1189, %v1392
        %1394 = vmatprep.mubr.bf16.mxu0 %v1119
        %1395 = vmatmul.mubr.bf16.gmra.mxu0 %v1118
        %v1396 = vpop.f32.mrf.mxu0
        %v1397 = vadd.f32 %v1185, %v1396
        %v1398 = vpop.f32.mrf.mxu0
        %v1399 = vadd.f32 %v1189, %v1398
        %v1400 = vpop.f32.mrf.mxu0
        %v1401 = vadd.f32 %v1185, %v1400
        %v1402 = vpop.f32.mrf.mxu0
        %v1403 = vadd.f32 %v1189, %v1402
        %1404 = vmatprep.mubr.bf16.mxu0 %v1121
        %1405 = vmatmul.mubr.bf16.gmra.mxu0 %v1120
        %v1406 = vpop.f32.mrf.mxu0
        %v1407 = vadd.f32 %v1185, %v1406
        %v1408 = vpop.f32.mrf.mxu0
        %v1409 = vadd.f32 %v1189, %v1408
        %v1410 = vpop.f32.mrf.mxu0
        %v1411 = vadd.f32 %v1185, %v1410
        %v1412 = vpop.f32.mrf.mxu0
        %v1413 = vadd.f32 %v1189, %v1412
        %1414 = vmatprep.mubr.bf16.mxu0 %v1123
        %1415 = vmatmul.mubr.bf16.gmra.mxu0 %v1122
        %v1416 = vpop.f32.mrf.mxu0
        %v1417 = vadd.f32 %v1185, %v1416
        %v1418 = vpop.f32.mrf.mxu0
        %v1419 = vadd.f32 %v1189, %v1418
        %v1420 = vpop.f32.mrf.mxu0
        %v1421 = vadd.f32 %v1185, %v1420
        %v1422 = vpop.f32.mrf.mxu0
        %v1423 = vadd.f32 %v1189, %v1422
        %1424 = vmatprep.mubr.bf16.mxu0 %v1125
        %1425 = vmatmul.mubr.bf16.gmra.mxu0 %v1124
        %v1426 = vpop.f32.mrf.mxu0
        %v1427 = vadd.f32 %v1185, %v1426
        %v1428 = vpop.f32.mrf.mxu0
        %v1429 = vadd.f32 %v1189, %v1428
        %v1430 = vpop.f32.mrf.mxu0
        %v1431 = vadd.f32 %v1185, %v1430
        %v1432 = vpop.f32.mrf.mxu0
        %v1433 = vadd.f32 %v1189, %v1432
        %1434 = vmatprep.mubr.bf16.mxu0 %v1127
        %1435 = vmatmul.mubr.bf16.gmra.mxu0 %v1126
        %v1436 = vpop.f32.mrf.mxu0
        %v1437 = vadd.f32 %v1185, %v1436
        %v1438 = vpop.f32.mrf.mxu0
        %v1439 = vadd.f32 %v1189, %v1438
        %v1440 = vpop.f32.mrf.mxu0
        %v1441 = vadd.f32 %v1185, %v1440
        %v1442 = vpop.f32.mrf.mxu0
        %v1443 = vadd.f32 %v1189, %v1442
        %1444 = vmatprep.mubr.bf16.mxu0 %v1129
        %1445 = vmatmul.mubr.bf16.gmra.mxu0 %v1128
        %v1446 = vpop.f32.mrf.mxu0
        %v1447 = vadd.f32 %v1185, %v1446
        %v1448 = vpop.f32.mrf.mxu0
        %v1449 = vadd.f32 %v1189, %v1448
        %v1450 = vpop.f32.mrf.mxu0
        %v1451 = vadd.f32 %v1185, %v1450
        %v1452 = vpop.f32.mrf.mxu0
        %v1453 = vadd.f32 %v1189, %v1452
        %1454 = vmatprep.mubr.bf16.mxu0 %v1131
        %1455 = vmatmul.mubr.bf16.gmra.mxu0 %v1130
        %v1456 = vpop.f32.mrf.mxu0
        %v1457 = vadd.f32 %v1185, %v1456
        %v1458 = vpop.f32.mrf.mxu0
        %v1459 = vadd.f32 %v1189, %v1458
        %v1460 = vpop.f32.mrf.mxu0
        %v1461 = vadd.f32 %v1185, %v1460
        %v1462 = vpop.f32.mrf.mxu0
        %v1463 = vadd.f32 %v1189, %v1462
        %1464 = vmatprep.mubr.bf16.mxu0 %v1133
        %1465 = vmatmul.mubr.bf16.gmra.mxu0 %v1132
        %v1466 = vpop.f32.mrf.mxu0
        %v1467 = vadd.f32 %v1185, %v1466
        %v1468 = vpop.f32.mrf.mxu0
        %v1469 = vadd.f32 %v1189, %v1468
        %v1470 = vpop.f32.mrf.mxu0
        %v1471 = vadd.f32 %v1185, %v1470
        %v1472 = vpop.f32.mrf.mxu0
        %v1473 = vadd.f32 %v1189, %v1472
        %1474 = vmatprep.mubr.bf16.mxu0 %v1135
        %1475 = vmatmul.mubr.bf16.gmra.mxu0 %v1134
        %v1476 = vpop.f32.mrf.mxu0
        %v1477 = vadd.f32 %v1185, %v1476
        %v1478 = vpop.f32.mrf.mxu0
        %v1479 = vadd.f32 %v1189, %v1478
        %v1480 = vpop.f32.mrf.mxu0
        %v1481 = vadd.f32 %v1185, %v1480
        %v1482 = vpop.f32.mrf.mxu0
        %v1483 = vadd.f32 %v1189, %v1482
        %1484 = vmatprep.mubr.bf16.mxu0 %v1137
        %1485 = vmatmul.mubr.bf16.gmra.mxu0 %v1136
        %v1486 = vpop.f32.mrf.mxu0
        %v1487 = vadd.f32 %v1185, %v1486
        %v1488 = vpop.f32.mrf.mxu0
        %v1489 = vadd.f32 %v1189, %v1488
        %v1490 = vpop.f32.mrf.mxu0
        %v1491 = vadd.f32 %v1185, %v1490
        %v1492 = vpop.f32.mrf.mxu0
        %v1493 = vadd.f32 %v1189, %v1492
        %1494 = vmatprep.mubr.bf16.mxu0 %v1139
        %1495 = vmatmul.mubr.bf16.gmra.mxu0 %v1138
        %v1496 = vpop.f32.mrf.mxu0
        %v1497 = vadd.f32 %v1185, %v1496
        %v1498 = vpop.f32.mrf.mxu0
        %v1499 = vadd.f32 %v1189, %v1498
        %v1500 = vpop.f32.mrf.mxu0
        %v1501 = vadd.f32 %v1185, %v1500
        %v1502 = vpop.f32.mrf.mxu0
        %v1503 = vadd.f32 %v1189, %v1502
        %1504 = vmatprep.mubr.bf16.mxu0 %v1141
        %1505 = vmatmul.mubr.bf16.gmra.mxu0 %v1140
        %v1506 = vpop.f32.mrf.mxu0
        %v1507 = vadd.f32 %v1185, %v1506
        %v1508 = vpop.f32.mrf.mxu0
        %v1509 = vadd.f32 %v1189, %v1508
        %v1510 = vpop.f32.mrf.mxu0
        %v1511 = vadd.f32 %v1185, %v1510
        %v1512 = vpop.f32.mrf.mxu0
        %v1513 = vadd.f32 %v1189, %v1512
        %1514 = vmatprep.mubr.bf16.mxu0 %v1143
        %1515 = vmatmul.mubr.bf16.gmra.mxu0 %v1142
        %v1516 = vpop.f32.mrf.mxu0
        %v1517 = vadd.f32 %v1185, %v1516
        %v1518 = vpop.f32.mrf.mxu0
        %v1519 = vadd.f32 %v1189, %v1518
        %v1520 = vpop.f32.mrf.mxu0
        %v1521 = vadd.f32 %v1185, %v1520
        %v1522 = vpop.f32.mrf.mxu0
        %v1523 = vadd.f32 %v1189, %v1522
        %1524 = vmatprep.mubr.bf16.mxu0 %v1145
        %1525 = vmatmul.mubr.bf16.gmra.mxu0 %v1144
        %v1526 = vpop.f32.mrf.mxu0
        %v1527 = vadd.f32 %v1185, %v1526
        %v1528 = vpop.f32.mrf.mxu0
        %v1529 = vadd.f32 %v1189, %v1528
        %v1530 = vpop.f32.mrf.mxu0
        %v1531 = vadd.f32 %v1185, %v1530
        %v1532 = vpop.f32.mrf.mxu0
        %v1533 = vadd.f32 %v1189, %v1532
        %1534 = vmatprep.mubr.bf16.mxu0 %v1147
        %1535 = vmatmul.mubr.bf16.gmra.mxu0 %v1146
        %v1536 = vpop.f32.mrf.mxu0
        %v1537 = vadd.f32 %v1185, %v1536
        %v1538 = vpop.f32.mrf.mxu0
        %v1539 = vadd.f32 %v1189, %v1538
        %v1540 = vpop.f32.mrf.mxu0
        %v1541 = vadd.f32 %v1185, %v1540
        %v1542 = vpop.f32.mrf.mxu0
        %v1543 = vadd.f32 %v1189, %v1542
        %1544 = vdwg.mxu0
        %v1545 = vmax.f32 %v1387, 0.0
        %v1546 = vmax.f32 %v1389, 0.0
        %v1547 = vmax.f32 %v1391, 0.0
        %v1548 = vmax.f32 %v1393, 0.0
        %v1549 = vmax.f32 %v1397, 0.0
        %v1550 = vmax.f32 %v1399, 0.0
        %v1551 = vmax.f32 %v1401, 0.0
        %v1552 = vmax.f32 %v1403, 0.0
        %v1553 = vmax.f32 %v1407, 0.0
        %v1554 = vmax.f32 %v1409, 0.0
        %v1555 = vmax.f32 %v1411, 0.0
        %v1556 = vmax.f32 %v1413, 0.0
        %v1557 = vmax.f32 %v1417, 0.0
        %v1558 = vmax.f32 %v1419, 0.0
        %v1559 = vmax.f32 %v1421, 0.0
        %v1560 = vmax.f32 %v1423, 0.0
        %v1561 = vmax.f32 %v1427, 0.0
        %v1562 = vmax.f32 %v1429, 0.0
        %v1563 = vmax.f32 %v1431, 0.0
        %v1564 = vmax.f32 %v1433, 0.0
        %v1565 = vmax.f32 %v1437, 0.0
        %v1566 = vmax.f32 %v1439, 0.0
        %v1567 = vmax.f32 %v1441, 0.0
        %v1568 = vmax.f32 %v1443, 0.0
        %v1569 = vmax.f32 %v1447, 0.0
        %v1570 = vmax.f32 %v1449, 0.0
        %v1571 = vmax.f32 %v1451, 0.0
        %v1572 = vmax.f32 %v1453, 0.0
        %v1573 = vmax.f32 %v1457, 0.0
        %v1574 = vmax.f32 %v1459, 0.0
        %v1575 = vmax.f32 %v1461, 0.0
        %v1576 = vmax.f32 %v1463, 0.0
        %v1577 = vmax.f32 %v1467, 0.0
        %v1578 = vmax.f32 %v1469, 0.0
        %v1579 = vmax.f32 %v1471, 0.0
        %v1580 = vmax.f32 %v1473, 0.0
        %v1581 = vmax.f32 %v1477, 0.0
        %v1582 = vmax.f32 %v1479, 0.0
        %v1583 = vmax.f32 %v1481, 0.0
        %v1584 = vmax.f32 %v1483, 0.0
        %v1585 = vmax.f32 %v1487, 0.0
        %v1586 = vmax.f32 %v1489, 0.0
        %v1587 = vmax.f32 %v1491, 0.0
        %v1588 = vmax.f32 %v1493, 0.0
        %v1589 = vmax.f32 %v1497, 0.0
        %v1590 = vmax.f32 %v1499, 0.0
        %v1591 = vmax.f32 %v1501, 0.0
        %v1592 = vmax.f32 %v1503, 0.0
        %v1593 = vmax.f32 %v1507, 0.0
        %v1594 = vmax.f32 %v1509, 0.0
        %v1595 = vmax.f32 %v1511, 0.0
        %v1596 = vmax.f32 %v1513, 0.0
        %v1597 = vmax.f32 %v1517, 0.0
        %v1598 = vmax.f32 %v1519, 0.0
        %v1599 = vmax.f32 %v1521, 0.0
        %v1600 = vmax.f32 %v1523, 0.0
        %v1601 = vmax.f32 %v1527, 0.0
        %v1602 = vmax.f32 %v1529, 0.0
        %v1603 = vmax.f32 %v1531, 0.0
        %v1604 = vmax.f32 %v1533, 0.0
        %v1605 = vmax.f32 %v1537, 0.0
        %v1606 = vmax.f32 %v1539, 0.0
        %v1607 = vmax.f32 %v1541, 0.0
        %v1608 = vmax.f32 %v1543, 0.0
        %v1609 = vld [vmem:[%s7] sm:$0x3]
        %v1610 = vld [vmem:[#allocation2] sm:$0x1]
        %1612 = vset.pattern.permute.xlu0 0
        %1613 = vperm.xlu0 %1612, %v1610
        %v1614 = vpop.permute.xlu0 %1613
        %v1616 = vlaneseq
        %v1617 = vshrl.u32 %v1616, 7
        %v1618 = vsub.s32 0, %v1617
        %v1619 = vrot.slane %v1614, %v1618
        %v1621 = vlaneseq
        %v1622 = vshrl.u32 %v1621, 7
        %v1623 = vsub.s32 0, %v1622
        %v1624 = vrot.slane %v1609, %v1623
        %v1625 = vlaneseq
        %v1626 = vshrl.u32 %v1625, 7
        %v1627 = vsub.s32 1, %v1626
        %v1628 = vrot.slane %v1609, %v1627
        %1631 = vmatprep.subr.mxu0 %v1576
        %1632 = vmatpush1.xpose.msra.mxu0 %v1575
        %1633 = vmatprep.subr.mxu0 %v1574
        %1634 = vmatpush1.xpose.msra.mxu0 %v1573
        %1635 = vmatprep.subr.mxu0 %v1572
        %1636 = vmatpush1.xpose.msra.mxu0 %v1571
        %1637 = vmatprep.subr.mxu0 %v1570
        %1638 = vmatpush1.xpose.msra.mxu0 %v1569
        %1639 = vmatprep.subr.mxu0 %v1568
        %1640 = vmatpush1.xpose.msra.mxu0 %v1567
        %1641 = vmatprep.subr.mxu0 %v1566
        %1642 = vmatpush1.xpose.msra.mxu0 %v1565
        %1643 = vmatprep.subr.mxu0 %v1564
        %1644 = vmatpush1.xpose.msra.mxu0 %v1563
        %1645 = vmatprep.subr.mxu0 %v1562
        %1646 = vmatpush1.xpose.msra.mxu0 %v1561
        %1647 = vmatprep.subr.mxu0 %v1560
        %1648 = vmatpush1.xpose.msra.mxu0 %v1559
        %1649 = vmatprep.subr.mxu0 %v1558
        %1650 = vmatpush1.xpose.msra.mxu0 %v1557
        %1651 = vmatprep.subr.mxu0 %v1556
        %1652 = vmatpush1.xpose.msra.mxu0 %v1555
        %1653 = vmatprep.subr.mxu0 %v1554
        %1654 = vmatpush1.xpose.msra.mxu0 %v1553
        %1655 = vmatprep.subr.mxu0 %v1552
        %1656 = vmatpush1.xpose.msra.mxu0 %v1551
        %1657 = vmatprep.subr.mxu0 %v1550
        %1658 = vmatpush1.xpose.msra.mxu0 %v1549
        %1659 = vmatprep.subr.mxu0 %v1548
        %1660 = vmatpush1.xpose.msra.mxu0 %v1547
        %1661 = vmatprep.subr.mxu0 %v1546
        %1662 = vmatpush1.xpose.msra.mxu0 %v1545
        %1663 = vmatprep.subr.mxu0 %v1608
        %1664 = vmatpush2.xpose.msra.mxu0 %v1607
        %1665 = vmatprep.subr.mxu0 %v1606
        %1666 = vmatpush2.xpose.msra.mxu0 %v1605
        %1667 = vmatprep.subr.mxu0 %v1604
        %1668 = vmatpush2.xpose.msra.mxu0 %v1603
        %1669 = vmatprep.subr.mxu0 %v1602
        %1670 = vmatpush2.xpose.msra.mxu0 %v1601
        %1671 = vmatprep.subr.mxu0 %v1600
        %1672 = vmatpush2.xpose.msra.mxu0 %v1599
        %1673 = vmatprep.subr.mxu0 %v1598
        %1674 = vmatpush2.xpose.msra.mxu0 %v1597
        %1675 = vmatprep.subr.mxu0 %v1596
        %1676 = vmatpush2.xpose.msra.mxu0 %v1595
        %1677 = vmatprep.subr.mxu0 %v1594
        %1678 = vmatpush2.xpose.msra.mxu0 %v1593
        %1679 = vmatprep.subr.mxu0 %v1592
        %1680 = vmatpush2.xpose.msra.mxu0 %v1591
        %1681 = vmatprep.subr.mxu0 %v1590
        %1682 = vmatpush2.xpose.msra.mxu0 %v1589
        %1683 = vmatprep.subr.mxu0 %v1588
        %1684 = vmatpush2.xpose.msra.mxu0 %v1587
        %1685 = vmatprep.subr.mxu0 %v1586
        %1686 = vmatpush2.xpose.msra.mxu0 %v1585
        %1687 = vmatprep.subr.mxu0 %v1584
        %1688 = vmatpush2.xpose.msra.mxu0 %v1583
        %1689 = vmatprep.subr.mxu0 %v1582
        %1690 = vmatpush2.xpose.msra.mxu0 %v1581
        %1691 = vmatprep.subr.mxu0 %v1580
        %1692 = vmatpush2.xpose.msra.mxu0 %v1579
        %1693 = vmatprep.subr.mxu0 %v1578
        %1694 = vmatpush2.xpose.msra.mxu0 %v1577
        %1695 = vmatprep.mubr.f32.mxu0 %v1628
        %1696 = vmatmul.mubr.f32.gmra.mxu0 %v1624
        %v1697 = vpop.f32.mrf.mxu0
        %v1698 = vadd.f32 %v1619, %v1697
        %v1699 = vpop.f32.mrf.mxu0
        %v1700 = vadd.f32 %v1619, %v1699
        %1701 = vdwg.mxu0
        %v1704 = vcombine.low %v1698, %v1700
        %v1706 = vunpack.c.l.s4 1966171168
        %v1707 = vunpack.c.0.s8 %v1706
        %v1708 = vlaneseq
        %v1709 = vshrl.u32 %v1708, 7
        %v1710 = vsub.s32 %v1707, %v1709
        %v1711 = vrot.slane %v1704, %v1710
        %v1713 = vunpack.c.l.s4 1966171168
        %v1714 = vunpack.c.0.s8 %v1713
        %v1715 = vlaneseq
        %v1716 = vshrl.u32 %v1715, 7
        %v1717 = vsub.s32 %v1714, %v1716
        %v1718 = vrot.slane %v1711, %v1717
        %v1720 = vlaneseq
        %vm1721 = vcmp.ge.s32.totalorder %v1720, 0
        %vm1722 = vcmp.lt.s32.totalorder %v1720, 256
        %vm1723 = vmand %vm1721, %vm1722
        %1724 = vst.msk [vmem:[%s344] sm:$0x3] %vm1723, %v1718
        %s1725 = sand.u32 %s232, 1
        %s1726 = scalar_lea.sflag [#allocation4], %s1725
        %s1727 = sand.u32 %s232, 1
        %s1728 = smul.addr %s1727, 2
        %s1729 = scalar_lea.vmem [#allocation3], %s1728
        // Predicated region
        $region57: #{tpu_custom_call.1} parent=55 // pred_check
          %p1730 = pneg %p242
        $region58: #{tpu_custom_call.1} parent=55 // pred_check_branch
          %1732 = sbr.rel (%p1730) target = $region60
        $region59: #{tpu_custom_call.1} parent=55 // pred_region
          %s1733 = smul.u32 2, %s25
          %s1735 = ssub.s32 32, 32
          %1736 = vsyncadd %s1726, %s1735
          %s1737 = smul.addr %s1733, 16
          %s1738 = scalar_lea.hbm %s9, %s1737
          %s1740 = sshll.u32 %s1729, 4
          %s1741 = int_to_ptr.vmem [resolvable:$true] %s1740
          %1743 = dma.vmem_to_hbm [thread:$0]  %s1741, 32, %s1738, %s1726
        $region60: #{tpu_custom_call.1} parent=55 // pred_fallthru
          _
      $region56: #{tpu_custom_call.1} parent=5 // pred_fallthru
        _
      %p1744 = scmp.le.s32.totalorder 2, %s20
      // Predicated region
      $region61: #{tpu_custom_call.1} parent=5 // pred_check
        %p1745 = pneg %p1744
      $region62: #{tpu_custom_call.1} parent=5 // pred_check_branch
        %1747 = sbr.rel (%p1745) target = $region64
      $region63: #{tpu_custom_call.1} parent=5 // pred_region
        %s1748 = ssub.s32 %s20, 2
        // Predicated region
        $region65: #{tpu_custom_call.1} parent=63 // pred_check
          %p1749 = pneg %p248
        $region66: #{tpu_custom_call.1} parent=63 // pred_check_branch
          %1751 = sbr.rel (%p1749) target = $region68
        $region67: #{tpu_custom_call.1} parent=63 // pred_region
          %s1752 = sand.u32 %s233, 1
          %s1753 = scalar_lea.sflag [#allocation4], %s1752
          %s1754 = sand.u32 %s233, 1
          %s1755 = smul.addr %s1754, 2
          %s1756 = scalar_lea.vmem [#allocation3], %s1755
          %1757 = dma.done %s1753, 32
        $region68: #{tpu_custom_call.1} parent=63 // pred_fallthru
          _
      $region64: #{tpu_custom_call.1} parent=5 // pred_fallthru
        _
    $region6: #{tpu_custom_call.1} parent=1 // loop_footer
      %s24 = sadd.s32 1, %s20
    $region7: #{tpu_custom_call.1} parent=1 // loop_footer_branch
      %19 = sbr.rel target = $region3
    $region8: #{tpu_custom_call.1} parent=1 // loop_exit
      _
    %1758 = vsyncpa [#allocation4], 1
    %s1759 = scalar_lea.sflag [#allocation4], 1
    %1760 = vsyncpa %s1759, 1

</llo_original>
